<compile_context>
chip_gen: v5e
topology: v5e:2x2
jax: 0.10.0
libtpu: 0.0.40
codegen_flags: <defaults>
</compile_context>

<pallas_src>
import jax
import jax.numpy as jnp
from jax.experimental import pallas as pl
from jax.experimental.pallas import tpu as pltpu

NUM_ATOM_FEATURES = 56  # full_atom_feature_dims = [2]*56
OUT_PAD = 128           # lane-dense output width (sliced back to out_dim in wrapper)


def _round_up(x, m):
    return ((x + m - 1) // m) * m


# ----------------------------- Pallas kernel ---------------------------------
def gcn_graph_kernel(
    adj_ref, xm0_ref, pool_ref,
    b0_ref, w1_ref, b1_ref, w2_ref, b2_ref,
    wlin_ref, blin_ref,
    out_ref,
    h1_buf, h2_buf, pooled_acc,
):
    layer = pl.program_id(0)      # 0,1,2 : GCN layer (sequential)
    i = pl.program_id(1)          # target-node row tile (sequential within layer)
    n_tiles = pl.num_programs(1)
    tm = adj_ref.shape[0]         # == n_pad when adjacency is fully resident
    row0 = pl.multiple_of(i * tm, tm)

    adj = adj_ref[...]            # bf16 [tm, n_pad]  (D^-1/2 (A+I) D^-1/2 row tile)

    @pl.when(layer == 0)
    def _layer0():
        # AtomEncoder + GCNConv0 + BatchNorm0(eval) folded; feature transform was
        # pre-applied in the wrapper (xm0 = xf_ext @ M0), so this is one matmul.
        h = jnp.dot(adj, xm0_ref[...], preferred_element_type=jnp.float32) + b0_ref[...]
        h1_buf[pl.ds(row0, tm), :] = jnp.maximum(h, 0.0).astype(jnp.bfloat16)

    @pl.when(layer == 1)
    def _layer1():
        # GCNConv1 + BatchNorm1(eval) folded + ReLU
        agg = jnp.dot(adj, h1_buf[...], preferred_element_type=jnp.float32)
        h = jnp.dot(agg.astype(jnp.bfloat16), w1_ref[...],
                    preferred_element_type=jnp.float32) + b1_ref[...]
        h2_buf[pl.ds(row0, tm), :] = jnp.maximum(h, 0.0).astype(jnp.bfloat16)

    @pl.when(layer == 2)
    def _layer2():
        @pl.when(i == 0)
        def _init():
            pooled_acc[...] = jnp.zeros_like(pooled_acc)

        # GCNConv2 (return_embeds=True: no BN/ReLU) for this row tile
        agg = jnp.dot(adj, h2_buf[...], preferred_element_type=jnp.float32)
        h3 = jnp.dot(agg.astype(jnp.bfloat16), w2_ref[...],
                     preferred_element_type=jnp.float32) + b2_ref[...]
        # global_mean_pool partial sum (pool rows already carry 1/count); bf16
        # MXU inputs, f32 accumulation.
        pooled_acc[...] += jnp.dot(pool_ref[...], h3.astype(jnp.bfloat16),
                                   preferred_element_type=jnp.float32)

        @pl.when(i == n_tiles - 1)
        def _final():
            out_ref[...] = jnp.dot(pooled_acc[...], wlin_ref[...],
                                   preferred_element_type=jnp.float32) + blin_ref[...]


# ------------------------------ param folding ---------------------------------
def prepare_params(raw, out_pad=OUT_PAD):
    """Fold eval-mode BatchNorm + AtomEncoder base into the conv weights/biases."""
    eps = 1e-5

    def bn_fold(g, b, m, v):
        s = g / jnp.sqrt(v + eps)
        return s, b - m * s

    s0, t0 = bn_fold(raw["bn0_gamma"], raw["bn0_beta"], raw["bn0_mean"], raw["bn0_var"])
    s1, t1 = bn_fold(raw["bn1_gamma"], raw["bn1_beta"], raw["bn1_mean"], raw["bn1_var"])

    # All feature dims are 2, so enc(x) = enc_base + xf @ enc_delta with x in {0,1}.
    tables = raw["tables"]                                      # [56, 2, H]
    enc_delta = tables[:, 1, :] - tables[:, 0, :]               # [56, H]
    enc_base = jnp.sum(tables[:, 0, :], axis=0, keepdims=True)  # [1, H]
    enc_ext = jnp.concatenate([enc_delta, enc_base], axis=0)    # [57, H]

    m0 = enc_ext @ (raw["w0"] * s0[None, :])                    # [57, H] f32
    b0f = (raw["b0"] * s0 + t0)[None, :]                        # [1, H] f32
    w1f = (raw["w1"] * s1[None, :]).astype(jnp.bfloat16)
    b1f = (raw["b1"] * s1 + t1)[None, :]
    w2 = raw["w2"].astype(jnp.bfloat16)
    b2 = raw["b2"][None, :]

    hidden = raw["w0"].shape[0]
    out_dim = raw["wlin"].shape[1]
    wlin_p = jnp.zeros((hidden, out_pad), jnp.float32).at[:, :out_dim].set(raw["wlin"])
    blin_p = jnp.zeros((1, out_pad), jnp.float32).at[:, :out_dim].set(raw["blin"][None, :])

    return dict(m0=m0, b0=b0f, w1=w1f, b1=b1f, w2=w2, b2=b2,
                wlin=wlin_p, blin=blin_p, out_dim=out_dim, hidden=hidden)


# --------------------------- VMEM budget / tiling ------------------------------
def _default_vmem_budget_bytes():
    # ~75% of physical VMEM: ~48 MiB on v7x (64 MiB), ~96 MiB on v5e/v6e (128 MiB).
    try:
        cap = pltpu.get_tpu_info().vmem_capacity_bytes
    except Exception:
        cap = 64 * 1024 * 1024
    return int(min(cap * 3 // 4, 100 * 1024 * 1024))


def _plan_tiling(n, hidden, g_pad, budget_bytes):
    """Pick (tm, n_pad). tm == n_pad => adjacency fully resident (fetched once)."""
    n128 = _round_up(max(n, 1), 128)
    # Residency that does not depend on the adjacency tile size (BlockSpec inputs
    # conservatively counted as double-buffered even with constant index maps).
    fixed = (
        2 * n128 * hidden * 2                 # h1/h2 scratch (bf16)
        + g_pad * hidden * 4                  # pooled accumulator
        + 2 * (n128 * hidden * 2)             # xm0 block (bf16)
        + 2 * (2 * hidden * hidden * 2)       # w1, w2 (bf16)
        + 2 * (3 * hidden * 4)                # biases
        + 2 * (hidden * OUT_PAD * 4 + OUT_PAD * 4)  # wlin, blin
        + 2 * (g_pad * OUT_PAD * 4)           # output block
    )

    def fits(tm):
        return fixed + 2 * (tm * n128 * 2) + 2 * (g_pad * tm * 2) <= budget_bytes

    if fits(n128):
        return n128, n128                     # resident adjacency, one tile / layer
    tm = 128
    for cand in (512, 256):
        if n128 % cand == 0 and fits(cand):
            tm = cand
            break
    return tm, n128


# ------------------------------ wrapper ---------------------------------------
def gcn_graph_forward(xf, adj, pool, raw_params, *, vmem_budget_bytes=None):
    n = adj.shape[0]
    g = pool.shape[0]
    p = prepare_params(raw_params)
    hidden, out_dim = p["hidden"], p["out_dim"]

    g_pad = _round_up(max(g, 1), 16)          # 16-sublane friendly for bf16 pool
    budget = vmem_budget_bytes or _default_vmem_budget_bytes()
    tm, n_pad = _plan_tiling(n, hidden, g_pad, budget)
    n_tiles = n_pad // tm

    # Weight-first reassociation for layer 0: xm0 = [xf, 1] @ (enc_ext @ W0') -- exact.
    xf_ext = jnp.concatenate([xf.astype(jnp.float32), jnp.ones((n, 1), jnp.float32)], axis=1)
    xm0 = xf_ext @ p["m0"]                    # [n, hidden] f32

    # Pad / cast host-side.  Padded *columns* of adj_p / pool_p are zero, which is
    # what keeps the nonzero relu(b0') values in padded h-rows from contaminating
    # real rows or the pooled sums.  Do not change this padding casually.
    adj_p = jnp.zeros((n_pad, n_pad), jnp.bfloat16).at[:n, :n].set(adj.astype(jnp.bfloat16))
    xm0_p = jnp.zeros((n_pad, hidden), jnp.bfloat16).at[:n, :].set(xm0.astype(jnp.bfloat16))
    pool_p = jnp.zeros((g_pad, n_pad), jnp.bfloat16).at[:g, :n].set(pool.astype(jnp.bfloat16))

    grid_spec = pltpu.PrefetchScalarGridSpec(
        num_scalar_prefetch=0,
        grid=(3, n_tiles),
        in_specs=[
            pl.BlockSpec((tm, n_pad), lambda l, i: (i, 0)),        # adj row tile (resident when tm==n_pad)
            pl.BlockSpec((n_pad, hidden), lambda l, i: (0, 0)),    # xm0 (resident)
            # pool column tile only advances during layer 2 (not used before that)
            pl.BlockSpec((g_pad, tm), lambda l, i: (0, jnp.where(l == 2, i, 0))),
            pl.BlockSpec((1, hidden), lambda l, i: (0, 0)),        # b0'
            pl.BlockSpec((hidden, hidden), lambda l, i: (0, 0)),   # W1'
            pl.BlockSpec((1, hidden), lambda l, i: (0, 0)),        # b1'
            pl.BlockSpec((hidden, hidden), lambda l, i: (0, 0)),   # W2
            pl.BlockSpec((1, hidden), lambda l, i: (0, 0)),        # b2
            pl.BlockSpec((hidden, OUT_PAD), lambda l, i: (0, 0)),  # Wlin (lane padded)
            pl.BlockSpec((1, OUT_PAD), lambda l, i: (0, 0)),       # blin
        ],
        out_specs=pl.BlockSpec((g_pad, OUT_PAD), lambda l, i: (0, 0)),
        scratch_shapes=[
            pltpu.VMEM((n_pad, hidden), jnp.bfloat16),   # H after layer 1
            pltpu.VMEM((n_pad, hidden), jnp.bfloat16),   # H after layer 2
            pltpu.VMEM((g_pad, hidden), jnp.float32),    # pooled accumulator
        ],
    )

    adj_passes = 1 if tm == n_pad else 3
    flops = int(
        2 * n_pad * n_pad * hidden * 3                   # three adjacency matmuls
        + 2 * n_pad * hidden * hidden * 2                # feature transforms (layers 1,2)
        + 2 * g_pad * n_pad * hidden                     # pooling
        + 2 * g_pad * hidden * OUT_PAD)                  # final linear
    bytes_accessed = int(
        adj_passes * n_pad * n_pad * 2                   # adjacency (bf16)
        + n_pad * hidden * 2                             # xm0
        + 2 * g_pad * n_pad * 2                          # pool (bf16)
        + 2 * hidden * hidden * 2 + hidden * OUT_PAD * 4
        + g_pad * OUT_PAD * 4)

    out = pl.pallas_call(
        gcn_graph_kernel,
        out_shape=jax.ShapeDtypeStruct((g_pad, OUT_PAD), jnp.float32),
        grid_spec=grid_spec,
        compiler_params=pltpu.CompilerParams(
            # Both axes must stay "arbitrary": cross-tile dependencies through the
            # resident h1/h2 buffers and the shared pooled accumulator.
            dimension_semantics=("arbitrary", "arbitrary"),
            vmem_limit_bytes=int(budget)),
        cost_estimate=pl.CostEstimate(flops=flops, transcendentals=0,
                                      bytes_accessed=bytes_accessed),
    )(adj_p, xm0_p, pool_p, p["b0"], p["w1"], p["b1"], p["w2"], p["b2"],
      p["wlin"], p["blin"])

    return out[:g, :out_dim]


# ------------------------------ glue (plain JAX) ------------------------------
def build_normalized_adjacency(edge_index, num_nodes):
    """PyG GCNConv normalization: D^-1/2 (A + I) D^-1/2, A[dst, src] = 1."""
    src, dst = edge_index[0], edge_index[1]
    a = jnp.zeros((num_nodes, num_nodes), jnp.float32)
    a = a.at[dst, src].add(1.0)
    a = a + jnp.eye(num_nodes, dtype=jnp.float32)
    deg = a.sum(axis=1)
    dinv = jnp.where(deg > 0, 1.0 / jnp.sqrt(deg), 0.0)
    return dinv[:, None] * a * dinv[None, :]


def build_mean_pool_matrix(batch, num_graphs):
    onehot = (batch[None, :] == jnp.arange(num_graphs)[:, None]).astype(jnp.float32)
    counts = onehot.sum(axis=1, keepdims=True)
    return onehot / jnp.maximum(counts, 1.0)


def init_params(key, hidden_dim, output_dim):
    """Raw module-equivalent parameters (PyTorch-style inits, eval-mode BN stats)."""
    ks = jax.random.split(key, 6)

    bound_emb = (6.0 / (2 + hidden_dim)) ** 0.5
    tables = jax.random.uniform(ks[0], (NUM_ATOM_FEATURES, 2, hidden_dim),
                                jnp.float32, -bound_emb, bound_emb)

    def glorot(k, fan_in, fan_out):
        b = (6.0 / (fan_in + fan_out)) ** 0.5
        return jax.random.uniform(k, (fan_in, fan_out), jnp.float32, -b, b)

    w0 = glorot(ks[1], hidden_dim, hidden_dim)
    w1 = glorot(ks[2], hidden_dim, hidden_dim)
    w2 = glorot(ks[3], hidden_dim, hidden_dim)
    zeros_h = jnp.zeros((hidden_dim,), jnp.float32)
    ones_h = jnp.ones((hidden_dim,), jnp.float32)

    bound_lin = 1.0 / (hidden_dim ** 0.5)
    wlin = jax.random.uniform(ks[4], (hidden_dim, output_dim), jnp.float32,
                              -bound_lin, bound_lin)
    blin = jax.random.uniform(ks[5], (output_dim,), jnp.float32,
                              -bound_lin, bound_lin)

    return dict(tables=tables,
                w0=w0, b0=zeros_h, w1=w1, b1=zeros_h, w2=w2, b2=zeros_h,
                bn0_gamma=ones_h, bn0_beta=zeros_h, bn0_mean=zeros_h, bn0_var=ones_h,
                bn1_gamma=ones_h, bn1_beta=zeros_h, bn1_mean=zeros_h, bn1_var=ones_h,
                wlin=wlin, blin=blin)


def reference_forward(x_int, adj, pool, raw):
    """Pure-JAX f32 reference matching the eval-mode PyTorch module."""
    eps = 1e-5
    tables = raw["tables"]
    h = tables[jnp.arange(NUM_ATOM_FEATURES)[None, :], x_int, :].sum(axis=1)

    def bn(x, g, b, m, v):
        return (x - m) / jnp.sqrt(v + eps) * g + b

    h = jax.nn.relu(bn(adj @ (h @ raw["w0"]) + raw["b0"],
                       raw["bn0_gamma"], raw["bn0_beta"], raw["bn0_mean"], raw["bn0_var"]))
    h = jax.nn.relu(bn(adj @ (h @ raw["w1"]) + raw["b1"],
                       raw["bn1_gamma"], raw["bn1_beta"], raw["bn1_mean"], raw["bn1_var"]))
    h = adj @ (h @ raw["w2"]) + raw["b2"]
    feats = pool @ h
    return feats @ raw["wlin"] + raw["blin"]


if __name__ == "__main__":
    key = jax.random.PRNGKey(0)
    k_x, k_p = jax.random.split(key)

    num_nodes = 32          # two graphs of 16 nodes each
    hidden_dim = 32
    output_dim = 8
    num_graphs = 2

    # Node features: [N, 56] integer features, each in {0, 1}.
    x_int = jax.random.randint(k_x, (num_nodes, NUM_ATOM_FEATURES), 0, 2)
    xf = x_int.astype(jnp.float32)

    # Deterministic bidirectional chain edges within each 16-node graph.
    src, dst = [], []
    for g0 in (0, 16):
        for i in range(15):
            a, b = g0 + i, g0 + i + 1
            src += [a, b]
            dst += [b, a]
    edge_index = jnp.array([src, dst], dtype=jnp.int32)

    batch = jnp.concatenate([jnp.zeros(16, jnp.int32), jnp.ones(16, jnp.int32)])

    adj = build_normalized_adjacency(edge_index, num_nodes)
    pool = build_mean_pool_matrix(batch, num_graphs)
    raw = init_params(k_p, hidden_dim, output_dim)

    out = gcn_graph_forward(xf, adj, pool, raw)
    out = jax.block_until_ready(out)

    ref = reference_forward(x_int, adj, pool, raw)

    assert out.shape == (num_graphs, output_dim)
    assert bool(jnp.all(jnp.isfinite(out)))
    assert bool(jnp.allclose(out, ref, rtol=0.1, atol=0.1)), (out, ref)
    print("KERNEL_OK")
</pallas_src>

<mosaic_0001>
module attributes {stable_mosaic.version = 11 : i64} {
  func.func @gcn_graph_kernel(%arg0: i32, %arg1: i32, %arg2: memref<128x128xbf16, #tpu.memory_space<vmem>>, %arg3: memref<128x32xbf16, #tpu.memory_space<vmem>>, %arg4: memref<16x128xbf16, #tpu.memory_space<vmem>>, %arg5: memref<1x32xf32, #tpu.memory_space<vmem>>, %arg6: memref<32x32xbf16, #tpu.memory_space<vmem>>, %arg7: memref<1x32xf32, #tpu.memory_space<vmem>>, %arg8: memref<32x32xbf16, #tpu.memory_space<vmem>>, %arg9: memref<1x32xf32, #tpu.memory_space<vmem>>, %arg10: memref<32x128xf32, #tpu.memory_space<vmem>>, %arg11: memref<1x128xf32, #tpu.memory_space<vmem>>, %arg12: memref<16x128xf32, #tpu.memory_space<vmem>>, %arg13: memref<128x32xbf16, #tpu.memory_space<vmem>>, %arg14: memref<128x32xbf16, #tpu.memory_space<vmem>>, %arg15: memref<16x32xf32, #tpu.memory_space<vmem>>) attributes {dimension_semantics = [#tpu.dimension_semantics<arbitrary>, #tpu.dimension_semantics<arbitrary>], iteration_bounds = array<i64: 3, 1>, scalar_prefetch = 0 : i64, scratch_operands = 3 : i64, tpu.core_type = #tpu.core_type<tc>, window_params = [{transform_indices = @transform_0, window_bounds = array<i64: 128, 128>}, {pipeline_mode = #tpu.pipeline_mode<synchronous>, transform_indices = @transform_1, window_bounds = array<i64: 128, 32>}, {transform_indices = @transform_2, window_bounds = array<i64: 16, 128>}, {pipeline_mode = #tpu.pipeline_mode<synchronous>, transform_indices = @transform_3, window_bounds = array<i64: 1, 32>}, {pipeline_mode = #tpu.pipeline_mode<synchronous>, transform_indices = @transform_4, window_bounds = array<i64: 32, 32>}, {pipeline_mode = #tpu.pipeline_mode<synchronous>, transform_indices = @transform_5, window_bounds = array<i64: 1, 32>}, {pipeline_mode = #tpu.pipeline_mode<synchronous>, transform_indices = @transform_6, window_bounds = array<i64: 32, 32>}, {pipeline_mode = #tpu.pipeline_mode<synchronous>, transform_indices = @transform_7, window_bounds = array<i64: 1, 32>}, {pipeline_mode = #tpu.pipeline_mode<synchronous>, transform_indices = @transform_8, window_bounds = array<i64: 32, 128>}, {pipeline_mode = #tpu.pipeline_mode<synchronous>, transform_indices = @transform_9, window_bounds = array<i64: 1, 128>}, {pipeline_mode = #tpu.pipeline_mode<synchronous>, transform_indices = @transform_10, window_bounds = array<i64: 16, 128>}]} {
    %c128_i32 = arith.constant 128 : i32
    %0 = arith.muli %arg1, %c128_i32 : i32
    %1 = tpu.assume_multiple %0, 128 : i32
    %c0 = arith.constant 0 : index
    %c0_0 = arith.constant 0 : index
    %2 = vector.load %arg2[%c0, %c0_0] : memref<128x128xbf16, #tpu.memory_space<vmem>>, vector<128x128xbf16>
    %c0_i32 = arith.constant 0 : i32
    %3 = arith.cmpi eq, %arg0, %c0_i32 : i32
    %4 = arith.extui %3 : i1 to i32
    %c0_i32_1 = arith.constant 0 : i32
    %5 = arith.cmpi ne, %4, %c0_i32_1 : i32
    scf.if %5 {
      %c0_4 = arith.constant 0 : index
      %c0_5 = arith.constant 0 : index
      %12 = vector.load %arg3[%c0_4, %c0_5] : memref<128x32xbf16, #tpu.memory_space<vmem>>, vector<128x32xbf16>
      %cst = arith.constant dense<0.000000e+00> : vector<128x32xf32>
      %13 = tpu.matmul %2, %12, %cst {dimension_numbers = #tpu.dot_dimension_numbers<[1], [0], [0], [1], [0, 0, 1, 1], [], []>} : vector<128x128xbf16>, vector<128x32xbf16>, vector<128x32xf32> -> vector<128x32xf32>
      %c0_6 = arith.constant 0 : index
      %c0_7 = arith.constant 0 : index
      %14 = vector.load %arg5[%c0_6, %c0_7] : memref<1x32xf32, #tpu.memory_space<vmem>>, vector<1x32xf32>
      %15 = vector.broadcast %14 : vector<1x32xf32> to vector<128x32xf32>
      %16 = arith.addf %13, %15 : vector<128x32xf32>
      %cst_8 = arith.constant 0.000000e+00 : f32
      %17 = vector.broadcast %cst_8 : f32 to vector<128x32xf32>
      %18 = arith.maximumf %16, %17 : vector<128x32xf32>
      %19 = arith.truncf %18 : vector<128x32xf32> to vector<128x32xbf16>
      %20 = arith.index_cast %1 : i32 to index
      %c0_9 = arith.constant 0 : index
      %21 = vector.load %arg13[%20, %c0_9] : memref<128x32xbf16, #tpu.memory_space<vmem>>, vector<128x32xbf16>
      tpu.vector_store %arg13[%20, %c0_9], %19 {strides = array<i32>} : memref<128x32xbf16, #tpu.memory_space<vmem>>, vector<128x32xbf16>,
    } else {
    }
    %c1_i32 = arith.constant 1 : i32
    %6 = arith.cmpi eq, %arg0, %c1_i32 : i32
    %7 = arith.extui %6 : i1 to i32
    %c0_i32_2 = arith.constant 0 : i32
    %8 = arith.cmpi ne, %7, %c0_i32_2 : i32
    scf.if %8 {
      %c0_4 = arith.constant 0 : index
      %c0_5 = arith.constant 0 : index
      %12 = vector.load %arg13[%c0_4, %c0_5] : memref<128x32xbf16, #tpu.memory_space<vmem>>, vector<128x32xbf16>
      %cst = arith.constant dense<0.000000e+00> : vector<128x32xf32>
      %13 = tpu.matmul %2, %12, %cst {dimension_numbers = #tpu.dot_dimension_numbers<[1], [0], [0], [1], [0, 0, 1, 1], [], []>} : vector<128x128xbf16>, vector<128x32xbf16>, vector<128x32xf32> -> vector<128x32xf32>
      %14 = arith.truncf %13 : vector<128x32xf32> to vector<128x32xbf16>
      %c0_6 = arith.constant 0 : index
      %c0_7 = arith.constant 0 : index
      %15 = vector.load %arg6[%c0_6, %c0_7] : memref<32x32xbf16, #tpu.memory_space<vmem>>, vector<32x32xbf16>
      %cst_8 = arith.constant dense<0.000000e+00> : vector<128x32xf32>
      %16 = tpu.matmul %14, %15, %cst_8 {dimension_numbers = #tpu.dot_dimension_numbers<[1], [0], [0], [1], [0, 0, 1, 1], [], []>} : vector<128x32xbf16>, vector<32x32xbf16>, vector<128x32xf32> -> vector<128x32xf32>
      %c0_9 = arith.constant 0 : index
      %c0_10 = arith.constant 0 : index
      %17 = vector.load %arg7[%c0_9, %c0_10] : memref<1x32xf32, #tpu.memory_space<vmem>>, vector<1x32xf32>
      %18 = vector.broadcast %17 : vector<1x32xf32> to vector<128x32xf32>
      %19 = arith.addf %16, %18 : vector<128x32xf32>
      %cst_11 = arith.constant 0.000000e+00 : f32
      %20 = vector.broadcast %cst_11 : f32 to vector<128x32xf32>
      %21 = arith.maximumf %19, %20 : vector<128x32xf32>
      %22 = arith.truncf %21 : vector<128x32xf32> to vector<128x32xbf16>
      %23 = arith.index_cast %1 : i32 to index
      %c0_12 = arith.constant 0 : index
      %24 = vector.load %arg14[%23, %c0_12] : memref<128x32xbf16, #tpu.memory_space<vmem>>, vector<128x32xbf16>
      tpu.vector_store %arg14[%23, %c0_12], %22 {strides = array<i32>} : memref<128x32xbf16, #tpu.memory_space<vmem>>, vector<128x32xbf16>,
    } else {
    }
    %c2_i32 = arith.constant 2 : i32
    %9 = arith.cmpi eq, %arg0, %c2_i32 : i32
    %10 = arith.extui %9 : i1 to i32
    %c0_i32_3 = arith.constant 0 : i32
    %11 = arith.cmpi ne, %10, %c0_i32_3 : i32
    scf.if %11 {
      %c0_i32_4 = arith.constant 0 : i32
      %12 = arith.cmpi eq, %arg1, %c0_i32_4 : i32
      %13 = arith.extui %12 : i1 to i32
      %c0_i32_5 = arith.constant 0 : i32
      %14 = arith.cmpi ne, %13, %c0_i32_5 : i32
      scf.if %14 {
        %cst_22 = arith.constant 0.000000e+00 : f32
        %32 = vector.broadcast %cst_22 : f32 to vector<16x32xf32>
        %c0_23 = arith.constant 0 : index
        %c0_24 = arith.constant 0 : index
        %33 = vector.load %arg15[%c0_23, %c0_24] : memref<16x32xf32, #tpu.memory_space<vmem>>, vector<16x32xf32>
        tpu.vector_store %arg15[%c0_23, %c0_24], %32 {strides = array<i32>} : memref<16x32xf32, #tpu.memory_space<vmem>>, vector<16x32xf32>,
      } else {
      }
      %c0_6 = arith.constant 0 : index
      %c0_7 = arith.constant 0 : index
      %15 = vector.load %arg14[%c0_6, %c0_7] : memref<128x32xbf16, #tpu.memory_space<vmem>>, vector<128x32xbf16>
      %cst = arith.constant dense<0.000000e+00> : vector<128x32xf32>
      %16 = tpu.matmul %2, %15, %cst {dimension_numbers = #tpu.dot_dimension_numbers<[1], [0], [0], [1], [0, 0, 1, 1], [], []>} : vector<128x128xbf16>, vector<128x32xbf16>, vector<128x32xf32> -> vector<128x32xf32>
      %17 = arith.truncf %16 : vector<128x32xf32> to vector<128x32xbf16>
      %c0_8 = arith.constant 0 : index
      %c0_9 = arith.constant 0 : index
      %18 = vector.load %arg8[%c0_8, %c0_9] : memref<32x32xbf16, #tpu.memory_space<vmem>>, vector<32x32xbf16>
      %cst_10 = arith.constant dense<0.000000e+00> : vector<128x32xf32>
      %19 = tpu.matmul %17, %18, %cst_10 {dimension_numbers = #tpu.dot_dimension_numbers<[1], [0], [0], [1], [0, 0, 1, 1], [], []>} : vector<128x32xbf16>, vector<32x32xbf16>, vector<128x32xf32> -> vector<128x32xf32>
      %c0_11 = arith.constant 0 : index
      %c0_12 = arith.constant 0 : index
      %20 = vector.load %arg9[%c0_11, %c0_12] : memref<1x32xf32, #tpu.memory_space<vmem>>, vector<1x32xf32>
      %21 = vector.broadcast %20 : vector<1x32xf32> to vector<128x32xf32>
      %22 = arith.addf %19, %21 : vector<128x32xf32>
      %c0_13 = arith.constant 0 : index
      %c0_14 = arith.constant 0 : index
      %23 = vector.load %arg15[%c0_13, %c0_14] : memref<16x32xf32, #tpu.memory_space<vmem>>, vector<16x32xf32>
      %c0_15 = arith.constant 0 : index
      %c0_16 = arith.constant 0 : index
      %24 = vector.load %arg4[%c0_15, %c0_16] : memref<16x128xbf16, #tpu.memory_space<vmem>>, vector<16x128xbf16>
      %25 = arith.truncf %22 : vector<128x32xf32> to vector<128x32xbf16>
      %cst_17 = arith.constant dense<0.000000e+00> : vector<16x32xf32>
      %26 = tpu.matmul %24, %25, %cst_17 {dimension_numbers = #tpu.dot_dimension_numbers<[1], [0], [0], [1], [0, 0, 1, 1], [], []>} : vector<16x128xbf16>, vector<128x32xbf16>, vector<16x32xf32> -> vector<16x32xf32>
      %27 = arith.addf %23, %26 : vector<16x32xf32>
      %c0_18 = arith.constant 0 : index
      %c0_19 = arith.constant 0 : index
      %28 = vector.load %arg15[%c0_18, %c0_19] : memref<16x32xf32, #tpu.memory_space<vmem>>, vector<16x32xf32>
      tpu.vector_store %arg15[%c0_18, %c0_19], %27 {strides = array<i32>} : memref<16x32xf32, #tpu.memory_space<vmem>>, vector<16x32xf32>,
      %c0_i32_20 = arith.constant 0 : i32
      %29 = arith.cmpi eq, %arg1, %c0_i32_20 : i32
      %30 = arith.extui %29 : i1 to i32
      %c0_i32_21 = arith.constant 0 : i32
      %31 = arith.cmpi ne, %30, %c0_i32_21 : i32
      scf.if %31 {
        %c0_22 = arith.constant 0 : index
        %c0_23 = arith.constant 0 : index
        %32 = vector.load %arg15[%c0_22, %c0_23] : memref<16x32xf32, #tpu.memory_space<vmem>>, vector<16x32xf32>
        %c0_24 = arith.constant 0 : index
        %c0_25 = arith.constant 0 : index
        %33 = vector.load %arg10[%c0_24, %c0_25] : memref<32x128xf32, #tpu.memory_space<vmem>>, vector<32x128xf32>
        %cst_26 = arith.constant dense<0.000000e+00> : vector<16x128xf32>
        %34 = tpu.matmul %32, %33, %cst_26 {dimension_numbers = #tpu.dot_dimension_numbers<[1], [0], [0], [1], [0, 0, 1, 1], [], []>} : vector<16x32xf32>, vector<32x128xf32>, vector<16x128xf32> -> vector<16x128xf32>
        %c0_27 = arith.constant 0 : index
        %c0_28 = arith.constant 0 : index
        %35 = vector.load %arg11[%c0_27, %c0_28] : memref<1x128xf32, #tpu.memory_space<vmem>>, vector<1x128xf32>
        %36 = vector.broadcast %35 : vector<1x128xf32> to vector<16x128xf32>
        %37 = arith.addf %34, %36 : vector<16x128xf32>
        %c0_29 = arith.constant 0 : index
        %c0_30 = arith.constant 0 : index
        %38 = vector.load %arg12[%c0_29, %c0_30] : memref<16x128xf32, #tpu.memory_space<vmem>>, vector<16x128xf32>
        tpu.vector_store %arg12[%c0_29, %c0_30], %37 {strides = array<i32>} : memref<16x128xf32, #tpu.memory_space<vmem>>, vector<16x128xf32>,
      } else {
      }
    } else {
    }
    return
  }
  func.func @transform_0(%arg0: i32, %arg1: i32) -> (i32, i32) {
    %c0_i32 = arith.constant 0 : i32
    %c0_i32_0 = arith.constant 0 : i32
    return %arg1, %c0_i32 : i32, i32
  }
  func.func @transform_1(%arg0: i32, %arg1: i32) -> (i32, i32) {
    %c0_i32 = arith.constant 0 : i32
    %c0_i32_0 = arith.constant 0 : i32
    %c0_i32_1 = arith.constant 0 : i32
    return %c0_i32, %c0_i32_0 : i32, i32
  }
  func.func @transform_2(%arg0: i32, %arg1: i32) -> (i32, i32) {
    %c2_i32 = arith.constant 2 : i32
    %0 = arith.cmpi eq, %arg0, %c2_i32 : i32
    %c0_i32 = arith.constant 0 : i32
    %1 = arith.select %0, %arg1, %c0_i32 : i32
    %c0_i32_0 = arith.constant 0 : i32
    %c0_i32_1 = arith.constant 0 : i32
    return %c0_i32_0, %1 : i32, i32
  }
  func.func @transform_3(%arg0: i32, %arg1: i32) -> (i32, i32) {
    %c0_i32 = arith.constant 0 : i32
    %c0_i32_0 = arith.constant 0 : i32
    %c0_i32_1 = arith.constant 0 : i32
    return %c0_i32, %c0_i32_0 : i32, i32
  }
  func.func @transform_4(%arg0: i32, %arg1: i32) -> (i32, i32) {
    %c0_i32 = arith.constant 0 : i32
    %c0_i32_0 = arith.constant 0 : i32
    %c0_i32_1 = arith.constant 0 : i32
    return %c0_i32, %c0_i32_0 : i32, i32
  }
  func.func @transform_5(%arg0: i32, %arg1: i32) -> (i32, i32) {
    %c0_i32 = arith.constant 0 : i32
    %c0_i32_0 = arith.constant 0 : i32
    %c0_i32_1 = arith.constant 0 : i32
    return %c0_i32, %c0_i32_0 : i32, i32
  }
  func.func @transform_6(%arg0: i32, %arg1: i32) -> (i32, i32) {
    %c0_i32 = arith.constant 0 : i32
    %c0_i32_0 = arith.constant 0 : i32
    %c0_i32_1 = arith.constant 0 : i32
    return %c0_i32, %c0_i32_0 : i32, i32
  }
  func.func @transform_7(%arg0: i32, %arg1: i32) -> (i32, i32) {
    %c0_i32 = arith.constant 0 : i32
    %c0_i32_0 = arith.constant 0 : i32
    %c0_i32_1 = arith.constant 0 : i32
    return %c0_i32, %c0_i32_0 : i32, i32
  }
  func.func @transform_8(%arg0: i32, %arg1: i32) -> (i32, i32) {
    %c0_i32 = arith.constant 0 : i32
    %c0_i32_0 = arith.constant 0 : i32
    %c0_i32_1 = arith.constant 0 : i32
    return %c0_i32, %c0_i32_0 : i32, i32
  }
  func.func @transform_9(%arg0: i32, %arg1: i32) -> (i32, i32) {
    %c0_i32 = arith.constant 0 : i32
    %c0_i32_0 = arith.constant 0 : i32
    %c0_i32_1 = arith.constant 0 : i32
    return %c0_i32, %c0_i32_0 : i32, i32
  }
  func.func @transform_10(%arg0: i32, %arg1: i32) -> (i32, i32) {
    %c0_i32 = arith.constant 0 : i32
    %c0_i32_0 = arith.constant 0 : i32
    %c0_i32_1 = arith.constant 0 : i32
    return %c0_i32, %c0_i32_0 : i32, i32
  }
}

</mosaic_0001>

<llo_original>
// kernel: tpu_custom_call.1
$region0: #{tpu_custom_call.1}
  #allocation0 [shape = 'u32[]', space=smem, size = 0x4, offset = 0x4, fixed_abs, tag = 'smem constant byte address 0x4 - core index']
  #allocation1 [shape = 'u32[72,128]{1,0:T(1,128)}', space=vmem, size = 0x9000, scoped, tag = 'internal scratch']
  #allocation2 [shape = 'bf16[128,32]{1,0:T(8,128)(2,1)}', space=vmem, size = 0x8000, scoped, tag = 'scratch operand']
  #allocation3 [shape = 'bf16[128,32]{1,0:T(8,128)(2,1)}', space=vmem, size = 0x8000, scoped, tag = 'scratch operand']
  #allocation4 [shape = 'f32[16,32]{1,0:T(8,128)}', space=vmem, size = 0x2000, scoped, tag = 'scratch operand']
  %s0 = inlined_call_operand.vmem [shape: bf16[128,128], index: 0, kind: input, shape index: {}]
  %s1 = inlined_call_operand.vmem [shape: bf16[128,32], index: 1, kind: input, shape index: {}]
  %s2 = inlined_call_operand.hbm [shape: bf16[16,128], index: 2, kind: input, shape index: {}]
  %s3 = inlined_call_operand.vmem [shape: f32[1,32], index: 3, kind: input, shape index: {}]
  %s4 = inlined_call_operand.vmem [shape: bf16[32,32], index: 4, kind: input, shape index: {}]
  %s5 = inlined_call_operand.vmem [shape: f32[1,32], index: 5, kind: input, shape index: {}]
  %s6 = inlined_call_operand.hbm [shape: bf16[32,32], index: 6, kind: input, shape index: {}]
  %s7 = inlined_call_operand.vmem [shape: f32[1,32], index: 7, kind: input, shape index: {}]
  %s8 = inlined_call_operand.hbm [shape: f32[32,128], index: 8, kind: input, shape index: {}]
  %s9 = inlined_call_operand.vmem [shape: f32[1,128], index: 9, kind: input, shape index: {}]
  %s10 = inlined_call_operand.hbm [shape: f32[16,128], index: 10, kind: output, shape index: {}]
  %s11 = sld [smem:[#allocation0]]
  $region105: #{tpu_custom_call.1} parent=0
    _
  %s13 = ssub.s32 1, %s11
  %s14 = scalar_select 0, %s13, %s11
  $region1: #{tpu_custom_call.1} parent=0
    #allocation5 [shape = 'u8[8192]{0}', space=vmem, size = 0x2000, scoped, tag = 'input window, operand 2']
    #allocation6 [shape = 's32[2]{0}', space=sflag, size = 0x8, scoped, tag = 'scoped memory for tpu_custom_call.1']
    #allocation7 [shape = 's32[2]{0}', space=sflag, size = 0x8, scoped, tag = 'scoped memory for tpu_custom_call.1']
    #allocation8 [shape = 'u8[8192]{0}', space=vmem, size = 0x2000, scoped, tag = 'input window, operand 6, single buffered']
    #allocation9 [shape = 's32[1]{0}', space=sflag, size = 0x4, scoped, tag = 'scoped memory for tpu_custom_call.1']
    #allocation10 [shape = 'u8[16384]{0}', space=vmem, size = 0x4000, scoped, tag = 'input window, operand 8, single buffered']
    #allocation11 [shape = 'u8[8192]{0}', space=vmem, size = 0x2000, scoped, tag = 'output window, operand 0, single buffered']
    %15 = vsyncpa [#allocation6], 0
    %s16 = scalar_lea.sflag [#allocation6], 1
    %17 = vsyncpa %s16, 0
    %18 = vsyncpa [#allocation9], 0
    %19 = vsyncpa [#allocation7], 0
    loop: start=0, step=1, limit=5
    $region2: #{tpu_custom_call.1} parent=1 // loop_pre_header
      _
    $region3: #{tpu_custom_call.1} parent=1 // loop_header
      %s21 = sphi 0, %s25
      %p22 = scmp.ge.s32.totalorder %s21, 5
      %s28 = sphi 0, %s40
      %s29 = sphi 0, %s36
      %s30 = sphi 0, %s28
      %s31 = sphi 0, %s29
      %s32 = sphi 0, %s30
      %s33 = sphi 0, %s31
      %s43 = sphi 0, %s45
      %s46 = sphi 0, %s43
      %s47 = sphi 0, %s46
      %s63 = sphi 0, %s47
      %s67 = sphi 0, %s67
      %s69 = sphi 0, %s67
      %s70 = sphi 0, %s69
      %s84 = sphi 0, %s70
      %s94 = sphi 0, %s96
      %s97 = sphi 0, %s94
      %s98 = sphi 0, %s97
      %s114 = sphi 0, %s98
      %s118 = sphi 0, %s118
      %s120 = sphi 0, %s118
      %s121 = sphi 0, %s120
      %s135 = sphi 0, %s121
      %s139 = sphi 0, %s139
      %s141 = sphi 0, %s139
      %s142 = sphi 0, %s141
      %s156 = sphi 0, %s142
      %s160 = sphi 0, %s160
      %s162 = sphi 0, %s160
      %s163 = sphi 0, %s162
      %s177 = sphi 0, %s163
      %s181 = sphi 0, %s181
      %s183 = sphi 0, %s181
      %s184 = sphi 0, %s183
      %s198 = sphi 0, %s184
      %s202 = sphi 0, %s202
      %s204 = sphi 0, %s202
      %s205 = sphi 0, %s204
      %s219 = sphi 0, %s205
      %s223 = sphi 0, %s223
      %s225 = sphi 0, %s223
      %s226 = sphi 0, %s225
      %s240 = sphi 0, %s226
      %s244 = sphi 0, %s244
      %s246 = sphi 0, %s244
      %s247 = sphi 0, %s246
      %s261 = sphi 0, %s247
      %s265 = sphi 0, %s265
      %s267 = sphi 0, %s265
      %s268 = sphi 0, %s267
      %s282 = sphi 0, %s268
    $region4: #{tpu_custom_call.1} parent=1 // loop_header_branch
      %24 = sbr.rel (%p22) target = $region8
    $region5: #{tpu_custom_call.1} parent=1 // loop_body
      %s26 = ssub.s32 %s21, 1
      %s27 = ssub.s32 %s21, 2
      %s34 = sadd.s32 1, %s29
      %p35 = scmp.ge.s32.totalorder %s34, 1
      %s36 = scalar_select %p35, 0, %s34
      %s37 = sadd.s32 1, %s28
      %s38 = scalar_select %p35, %s37, %s28
      %p39 = scmp.ge.s32.totalorder %s38, 3
      %s40 = scalar_select %p39, 0, %s38
      %s41 = ssub.s32 %s29, %s36
      %p42 = scmp.eq.s32.totalorder %s41, 0
      %s44 = sadd.s32 %s43, 1
      %s45 = scalar_select %p42, %s43, %s44
      %p48 = pneg %p42
      %p49 = scmp.eq.s32.totalorder %s21, 2
      %p50 = por %p48, %p49
      %p51 = scmp.ne.s32.totalorder %s43, %s46
      %p52 = scmp.eq.s32.totalorder %s21, 0
      %p53 = por %p51, %p52
      %p54 = scmp.ne.s32.totalorder %s43, %s46
      %p55 = scmp.eq.s32.totalorder %s26, 2
      %p56 = por %p54, %p55
      %p57 = scmp.ne.s32.totalorder %s46, %s47
      %p58 = scmp.eq.s32.totalorder %s26, 0
      %p59 = por %p57, %p58
      %p60 = scmp.ne.s32.totalorder %s46, %s47
      %p61 = scmp.eq.s32.totalorder %s27, 2
      %p62 = por %p60, %p61
      %p64 = scmp.ne.s32.totalorder %s47, %s63
      %p65 = scmp.eq.s32.totalorder %s27, 0
      %p66 = por %p64, %p65
      %s68 = sadd.s32 %s67, 1
      %p71 = scmp.eq.s32.totalorder %s21, 2
      %p72 = scmp.ne.s32.totalorder %s67, %s69
      %p73 = scmp.eq.s32.totalorder %s21, 0
      %p74 = por %p72, %p73
      %p75 = scmp.ne.s32.totalorder %s67, %s69
      %p76 = scmp.eq.s32.totalorder %s26, 2
      %p77 = por %p75, %p76
      %p78 = scmp.ne.s32.totalorder %s69, %s70
      %p79 = scmp.eq.s32.totalorder %s26, 0
      %p80 = por %p78, %p79
      %p81 = scmp.ne.s32.totalorder %s69, %s70
      %p82 = scmp.eq.s32.totalorder %s27, 2
      %p83 = por %p81, %p82
      %p85 = scmp.ne.s32.totalorder %s70, %s84
      %p86 = scmp.eq.s32.totalorder %s27, 0
      %p87 = por %p85, %p86
      %p88 = scmp.eq.s32.totalorder %s28, 2
      %s89 = scalar_select %p88, %s29, 0
      %p90 = scmp.eq.s32.totalorder %s40, 2
      %s91 = scalar_select %p90, %s36, 0
      %s92 = ssub.s32 %s89, %s91
      %p93 = scmp.eq.s32.totalorder %s92, 0
      %s95 = sadd.s32 %s94, 1
      %s96 = scalar_select %p93, %s94, %s95
      %p99 = pneg %p93
      %p100 = scmp.eq.s32.totalorder %s21, 2
      %p101 = por %p99, %p100
      %p102 = scmp.ne.s32.totalorder %s94, %s97
      %p103 = scmp.eq.s32.totalorder %s21, 0
      %p104 = por %p102, %p103
      %p105 = scmp.ne.s32.totalorder %s94, %s97
      %p106 = scmp.eq.s32.totalorder %s26, 2
      %p107 = por %p105, %p106
      %p108 = scmp.ne.s32.totalorder %s97, %s98
      %p109 = scmp.eq.s32.totalorder %s26, 0
      %p110 = por %p108, %p109
      %p111 = scmp.ne.s32.totalorder %s97, %s98
      %p112 = scmp.eq.s32.totalorder %s27, 2
      %p113 = por %p111, %p112
      %p115 = scmp.ne.s32.totalorder %s98, %s114
      %p116 = scmp.eq.s32.totalorder %s27, 0
      %p117 = por %p115, %p116
      %s119 = sadd.s32 %s118, 1
      %p122 = scmp.eq.s32.totalorder %s21, 2
      %p123 = scmp.ne.s32.totalorder %s118, %s120
      %p124 = scmp.eq.s32.totalorder %s21, 0
      %p125 = por %p123, %p124
      %p126 = scmp.ne.s32.totalorder %s118, %s120
      %p127 = scmp.eq.s32.totalorder %s26, 2
      %p128 = por %p126, %p127
      %p129 = scmp.ne.s32.totalorder %s120, %s121
      %p130 = scmp.eq.s32.totalorder %s26, 0
      %p131 = por %p129, %p130
      %p132 = scmp.ne.s32.totalorder %s120, %s121
      %p133 = scmp.eq.s32.totalorder %s27, 2
      %p134 = por %p132, %p133
      %p136 = scmp.ne.s32.totalorder %s121, %s135
      %p137 = scmp.eq.s32.totalorder %s27, 0
      %p138 = por %p136, %p137
      %s140 = sadd.s32 %s139, 1
      %p143 = scmp.eq.s32.totalorder %s21, 2
      %p144 = scmp.ne.s32.totalorder %s139, %s141
      %p145 = scmp.eq.s32.totalorder %s21, 0
      %p146 = por %p144, %p145
      %p147 = scmp.ne.s32.totalorder %s139, %s141
      %p148 = scmp.eq.s32.totalorder %s26, 2
      %p149 = por %p147, %p148
      %p150 = scmp.ne.s32.totalorder %s141, %s142
      %p151 = scmp.eq.s32.totalorder %s26, 0
      %p152 = por %p150, %p151
      %p153 = scmp.ne.s32.totalorder %s141, %s142
      %p154 = scmp.eq.s32.totalorder %s27, 2
      %p155 = por %p153, %p154
      %p157 = scmp.ne.s32.totalorder %s142, %s156
      %p158 = scmp.eq.s32.totalorder %s27, 0
      %p159 = por %p157, %p158
      %s161 = sadd.s32 %s160, 1
      %p164 = scmp.eq.s32.totalorder %s21, 2
      %p165 = scmp.ne.s32.totalorder %s160, %s162
      %p166 = scmp.eq.s32.totalorder %s21, 0
      %p167 = por %p165, %p166
      %p168 = scmp.ne.s32.totalorder %s160, %s162
      %p169 = scmp.eq.s32.totalorder %s26, 2
      %p170 = por %p168, %p169
      %p171 = scmp.ne.s32.totalorder %s162, %s163
      %p172 = scmp.eq.s32.totalorder %s26, 0
      %p173 = por %p171, %p172
      %p174 = scmp.ne.s32.totalorder %s162, %s163
      %p175 = scmp.eq.s32.totalorder %s27, 2
      %p176 = por %p174, %p175
      %p178 = scmp.ne.s32.totalorder %s163, %s177
      %p179 = scmp.eq.s32.totalorder %s27, 0
      %p180 = por %p178, %p179
      %s182 = sadd.s32 %s181, 1
      %p185 = scmp.eq.s32.totalorder %s21, 2
      %p186 = scmp.ne.s32.totalorder %s181, %s183
      %p187 = scmp.eq.s32.totalorder %s21, 0
      %p188 = por %p186, %p187
      %p189 = scmp.ne.s32.totalorder %s181, %s183
      %p190 = scmp.eq.s32.totalorder %s26, 2
      %p191 = por %p189, %p190
      %p192 = scmp.ne.s32.totalorder %s183, %s184
      %p193 = scmp.eq.s32.totalorder %s26, 0
      %p194 = por %p192, %p193
      %p195 = scmp.ne.s32.totalorder %s183, %s184
      %p196 = scmp.eq.s32.totalorder %s27, 2
      %p197 = por %p195, %p196
      %p199 = scmp.ne.s32.totalorder %s184, %s198
      %p200 = scmp.eq.s32.totalorder %s27, 0
      %p201 = por %p199, %p200
      %s203 = sadd.s32 %s202, 1
      %p206 = scmp.eq.s32.totalorder %s21, 2
      %p207 = scmp.ne.s32.totalorder %s202, %s204
      %p208 = scmp.eq.s32.totalorder %s21, 0
      %p209 = por %p207, %p208
      %p210 = scmp.ne.s32.totalorder %s202, %s204
      %p211 = scmp.eq.s32.totalorder %s26, 2
      %p212 = por %p210, %p211
      %p213 = scmp.ne.s32.totalorder %s204, %s205
      %p214 = scmp.eq.s32.totalorder %s26, 0
      %p215 = por %p213, %p214
      %p216 = scmp.ne.s32.totalorder %s204, %s205
      %p217 = scmp.eq.s32.totalorder %s27, 2
      %p218 = por %p216, %p217
      %p220 = scmp.ne.s32.totalorder %s205, %s219
      %p221 = scmp.eq.s32.totalorder %s27, 0
      %p222 = por %p220, %p221
      %s224 = sadd.s32 %s223, 1
      %p227 = scmp.eq.s32.totalorder %s21, 2
      %p228 = scmp.ne.s32.totalorder %s223, %s225
      %p229 = scmp.eq.s32.totalorder %s21, 0
      %p230 = por %p228, %p229
      %p231 = scmp.ne.s32.totalorder %s223, %s225
      %p232 = scmp.eq.s32.totalorder %s26, 2
      %p233 = por %p231, %p232
      %p234 = scmp.ne.s32.totalorder %s225, %s226
      %p235 = scmp.eq.s32.totalorder %s26, 0
      %p236 = por %p234, %p235
      %p237 = scmp.ne.s32.totalorder %s225, %s226
      %p238 = scmp.eq.s32.totalorder %s27, 2
      %p239 = por %p237, %p238
      %p241 = scmp.ne.s32.totalorder %s226, %s240
      %p242 = scmp.eq.s32.totalorder %s27, 0
      %p243 = por %p241, %p242
      %s245 = sadd.s32 %s244, 1
      %p248 = scmp.eq.s32.totalorder %s21, 2
      %p249 = scmp.ne.s32.totalorder %s244, %s246
      %p250 = scmp.eq.s32.totalorder %s21, 0
      %p251 = por %p249, %p250
      %p252 = scmp.ne.s32.totalorder %s244, %s246
      %p253 = scmp.eq.s32.totalorder %s26, 2
      %p254 = por %p252, %p253
      %p255 = scmp.ne.s32.totalorder %s246, %s247
      %p256 = scmp.eq.s32.totalorder %s26, 0
      %p257 = por %p255, %p256
      %p258 = scmp.ne.s32.totalorder %s246, %s247
      %p259 = scmp.eq.s32.totalorder %s27, 2
      %p260 = por %p258, %p259
      %p262 = scmp.ne.s32.totalorder %s247, %s261
      %p263 = scmp.eq.s32.totalorder %s27, 0
      %p264 = por %p262, %p263
      %s266 = sadd.s32 %s265, 1
      %p269 = scmp.eq.s32.totalorder %s21, 2
      %p270 = scmp.ne.s32.totalorder %s265, %s267
      %p271 = scmp.eq.s32.totalorder %s21, 0
      %p272 = por %p270, %p271
      %p273 = scmp.ne.s32.totalorder %s265, %s267
      %p274 = scmp.eq.s32.totalorder %s26, 2
      %p275 = por %p273, %p274
      %p276 = scmp.ne.s32.totalorder %s267, %s268
      %p277 = scmp.eq.s32.totalorder %s26, 0
      %p278 = por %p276, %p277
      %p279 = scmp.ne.s32.totalorder %s267, %s268
      %p280 = scmp.eq.s32.totalorder %s27, 2
      %p281 = por %p279, %p280
      %p283 = scmp.ne.s32.totalorder %s268, %s282
      %p284 = scmp.eq.s32.totalorder %s27, 0
      %p285 = por %p283, %p284
      %p286 = scmp.le.s32.totalorder 1, %s21
      %p287 = scmp.lt.s32.totalorder %s21, 4
      %p288 = pnand %p286, %p287
      %p289 = pneg %p288
      // Predicated region
      $region9: #{tpu_custom_call.1} parent=5 // pred_check
        _
      $region10: #{tpu_custom_call.1} parent=5 // pred_check_branch
        %291 = sbr.rel (%p288) target = $region12
      $region11: #{tpu_custom_call.1} parent=5 // pred_region
        %s292 = ssub.s32 %s21, 1
        // Predicated region
        $region13: #{tpu_custom_call.1} parent=11 // pred_check
          %p293 = pneg %p59
        $region14: #{tpu_custom_call.1} parent=11 // pred_check_branch
          %295 = sbr.rel (%p293) target = $region16
        $region15: #{tpu_custom_call.1} parent=11 // pred_region
          %s296 = smul.u32 16, %s31
          %p297 = scmp.lt.s32.totalorder %s296, 15
          %s298 = scalar_select %p297, %s296, 15
          %s299 = smul.addr %s298, 4
          %s300 = scalar_lea.vmem %s0, %s299
          %s301 = smul.u32 16, %s31
        $region16: #{tpu_custom_call.1} parent=11 // pred_fallthru
          _
        // Predicated region
        $region17: #{tpu_custom_call.1} parent=11 // pred_check
          %p302 = pneg %p80
        $region18: #{tpu_custom_call.1} parent=11 // pred_check_branch
          %304 = sbr.rel (%p302) target = $region20
        $region19: #{tpu_custom_call.1} parent=11 // pred_region
          _
        $region20: #{tpu_custom_call.1} parent=11 // pred_fallthru
          _
        // Predicated region
        $region21: #{tpu_custom_call.1} parent=11 // pred_check
          %p305 = pneg %p131
        $region22: #{tpu_custom_call.1} parent=11 // pred_check_branch
          %307 = sbr.rel (%p305) target = $region24
        $region23: #{tpu_custom_call.1} parent=11 // pred_region
          _
        $region24: #{tpu_custom_call.1} parent=11 // pred_fallthru
          _
        // Predicated region
        $region25: #{tpu_custom_call.1} parent=11 // pred_check
          %p308 = pneg %p152
        $region26: #{tpu_custom_call.1} parent=11 // pred_check_branch
          %310 = sbr.rel (%p308) target = $region28
        $region27: #{tpu_custom_call.1} parent=11 // pred_region
          _
        $region28: #{tpu_custom_call.1} parent=11 // pred_fallthru
          _
        // Predicated region
        $region29: #{tpu_custom_call.1} parent=11 // pred_check
          %p311 = pneg %p173
        $region30: #{tpu_custom_call.1} parent=11 // pred_check_branch
          %313 = sbr.rel (%p311) target = $region32
        $region31: #{tpu_custom_call.1} parent=11 // pred_region
          _
        $region32: #{tpu_custom_call.1} parent=11 // pred_fallthru
          _
        // Predicated region
        $region33: #{tpu_custom_call.1} parent=11 // pred_check
          %p314 = pneg %p194
        $region34: #{tpu_custom_call.1} parent=11 // pred_check_branch
          %316 = sbr.rel (%p314) target = $region36
        $region35: #{tpu_custom_call.1} parent=11 // pred_region
          %318 = vsyncadd [#allocation9], 0
          %s319 = sshll.u32 %s6, 4
          %s320 = int_to_ptr.hbm [resolvable:$true] %s319
          %s321 = sshll.u32 [#allocation8], 4
          %s322 = int_to_ptr.vmem [resolvable:$true] %s321
          %327 = dma.hbm_to_vmem [thread:$0]  %s320, 256, %s322, [#allocation9], 64, 64, 4
        $region36: #{tpu_custom_call.1} parent=11 // pred_fallthru
          _
        // Predicated region
        $region37: #{tpu_custom_call.1} parent=11 // pred_check
          %p328 = pneg %p215
        $region38: #{tpu_custom_call.1} parent=11 // pred_check_branch
          %330 = sbr.rel (%p328) target = $region40
        $region39: #{tpu_custom_call.1} parent=11 // pred_region
          _
        $region40: #{tpu_custom_call.1} parent=11 // pred_fallthru
          _
        // Predicated region
        $region41: #{tpu_custom_call.1} parent=11 // pred_check
          %p331 = pneg %p236
        $region42: #{tpu_custom_call.1} parent=11 // pred_check_branch
          %333 = sbr.rel (%p331) target = $region44
        $region43: #{tpu_custom_call.1} parent=11 // pred_region
          %335 = vsyncadd [#allocation9], 0
          %s336 = sshll.u32 %s8, 4
          %s337 = int_to_ptr.hbm [resolvable:$true] %s336
          %s338 = sshll.u32 [#allocation10], 4
          %s339 = int_to_ptr.vmem [resolvable:$true] %s338
          %344 = dma.hbm_to_vmem [thread:$0]  %s337, 512, %s339, [#allocation9], 128, 128, 8
        $region44: #{tpu_custom_call.1} parent=11 // pred_fallthru
          _
        // Predicated region
        $region45: #{tpu_custom_call.1} parent=11 // pred_check
          %p345 = pneg %p257
        $region46: #{tpu_custom_call.1} parent=11 // pred_check_branch
          %347 = sbr.rel (%p345) target = $region48
        $region47: #{tpu_custom_call.1} parent=11 // pred_region
          _
        $region48: #{tpu_custom_call.1} parent=11 // pred_fallthru
          _
      $region12: #{tpu_custom_call.1} parent=5 // pred_fallthru
        _
      %p348 = scmp.lt.s32.totalorder %s21, 3
      // Predicated region
      $region49: #{tpu_custom_call.1} parent=5 // pred_check
        %p349 = pneg %p348
      $region50: #{tpu_custom_call.1} parent=5 // pred_check_branch
        %351 = sbr.rel (%p349) target = $region52
      $region51: #{tpu_custom_call.1} parent=5 // pred_region
        // Predicated region
        $region53: #{tpu_custom_call.1} parent=51 // pred_check
          %p352 = pneg %p104
        $region54: #{tpu_custom_call.1} parent=51 // pred_check_branch
          %354 = sbr.rel (%p352) target = $region56
        $region55: #{tpu_custom_call.1} parent=51 // pred_region
          %s355 = sand.u32 %s94, 1
          %s356 = scalar_lea.sflag [#allocation6], %s355
          %s357 = sand.u32 %s94, 1
          %s358 = smul.addr %s357, 8
          %s359 = scalar_lea.vmem [#allocation5], %s358
          %p360 = scmp.eq.s32.totalorder %s28, 2
          %s361 = scalar_select %p360, %s29, 0
          %363 = vsyncadd %s356, 0
          %s364 = smul.addr %s361, 4
          %s365 = scalar_lea.hbm %s2, %s364
          %s366 = sshll.u32 %s365, 4
          %s367 = int_to_ptr.hbm [resolvable:$true] %s366
          %s368 = sshll.u32 %s359, 4
          %s369 = int_to_ptr.vmem [resolvable:$true] %s368
          %374 = dma.hbm_to_vmem [thread:$0]  %s367, 128, %s369, %s356, 64, 64, 4
        $region56: #{tpu_custom_call.1} parent=51 // pred_fallthru
          _
      $region52: #{tpu_custom_call.1} parent=5 // pred_fallthru
        _
      %p375 = scmp.le.s32.totalorder 1, %s21
      %p376 = scmp.lt.s32.totalorder %s21, 4
      %p377 = pnand %p375, %p376
      %p378 = pneg %p377
      // Predicated region
      $region57: #{tpu_custom_call.1} parent=5 // pred_check
        _
      $region58: #{tpu_custom_call.1} parent=5 // pred_check_branch
        %380 = sbr.rel (%p377) target = $region60
      $region59: #{tpu_custom_call.1} parent=5 // pred_region
        %s381 = ssub.s32 %s21, 1
        %s382 = sand.u32 %s97, 1
        %s383 = scalar_lea.sflag [#allocation6], %s382
        %s384 = sand.u32 %s97, 1
        %s385 = smul.addr %s384, 8
        %s386 = scalar_lea.vmem [#allocation5], %s385
        // Predicated region
        $region61: #{tpu_custom_call.1} parent=59 // pred_check
          %p387 = pneg %p110
        $region62: #{tpu_custom_call.1} parent=59 // pred_check_branch
          %389 = sbr.rel (%p387) target = $region64
        $region63: #{tpu_custom_call.1} parent=59 // pred_region
          %391 = dma.done %s383, 128
        $region64: #{tpu_custom_call.1} parent=59 // pred_fallthru
          _
        // Predicated region
        $region65: #{tpu_custom_call.1} parent=59 // pred_check
          %p392 = pneg %p194
        $region66: #{tpu_custom_call.1} parent=59 // pred_check_branch
          %394 = sbr.rel (%p392) target = $region68
        $region67: #{tpu_custom_call.1} parent=59 // pred_region
          %396 = dma.done [#allocation9], 256
        $region68: #{tpu_custom_call.1} parent=59 // pred_fallthru
          _
        // Predicated region
        $region69: #{tpu_custom_call.1} parent=59 // pred_check
          %p397 = pneg %p236
        $region70: #{tpu_custom_call.1} parent=59 // pred_check_branch
          %399 = sbr.rel (%p397) target = $region72
        $region71: #{tpu_custom_call.1} parent=59 // pred_region
          %401 = dma.done [#allocation9], 512
        $region72: #{tpu_custom_call.1} parent=59 // pred_fallthru
          _
        %s402 = smul.u32 16, %s31
        %p403 = scmp.lt.s32.totalorder %s402, 15
        %s404 = scalar_select %p403, %s402, 15
        %s405 = smul.addr %s404, 4
        %s406 = scalar_lea.vmem %s0, %s405
        %p407 = pneg %p59
        %p408 = pneg %p56
        %p409 = pneg %p80
        %p410 = pneg %p77
        %s411 = sand.u32 %s97, 1
        %s412 = scalar_lea.sflag [#allocation6], %s411
        %s413 = sand.u32 %s97, 1
        %s414 = smul.addr %s413, 8
        %s415 = scalar_lea.vmem [#allocation5], %s414
        %p416 = pneg %p110
        %p417 = pneg %p107
        %p418 = pneg %p131
        %p419 = pneg %p128
        %p420 = pneg %p152
        %p421 = pneg %p149
        %p422 = pneg %p173
        %p423 = pneg %p170
        %p424 = pneg %p194
        %p425 = pneg %p191
        %p426 = pneg %p215
        %p427 = pneg %p212
        %p428 = pneg %p236
        %p429 = pneg %p233
        %p430 = pneg %p257
        %p431 = pneg %p254
        %p432 = pneg %p278
        %p433 = pneg %p275
        %s434 = smul.u32 16, %s31
        %p435 = scmp.lt.s32.totalorder %s434, 15
        %s436 = scalar_select %p435, %s434, 15
        %s437 = smul.addr %s436, 4
        %s438 = scalar_lea.vmem %s0, %s437
        %s439 = smul.u32 16, %s31
        %p440 = scmp.eq.s32.totalorder %s30, 2
        %s441 = scalar_select %p440, %s31, 0
        %s443 = smul.u32 %s31, 128
        %v444 = vld [vmem:[%s438] sm:$0xf]
        %v445 = vld [vmem:[%s438 + $0x4] sm:$0xf]
        %v446 = vld [vmem:[%s438 + $0x8] sm:$0xf]
        %v447 = vld [vmem:[%s438 + $0xc] sm:$0xf]
        %v448 = vld [vmem:[%s438 + $0x10] sm:$0xf]
        %v449 = vld [vmem:[%s438 + $0x14] sm:$0xf]
        %v450 = vld [vmem:[%s438 + $0x18] sm:$0xf]
        %v451 = vld [vmem:[%s438 + $0x1c] sm:$0xf]
        %v452 = vld [vmem:[%s438 + $0x20] sm:$0xf]
        %v453 = vld [vmem:[%s438 + $0x24] sm:$0xf]
        %v454 = vld [vmem:[%s438 + $0x28] sm:$0xf]
        %v455 = vld [vmem:[%s438 + $0x2c] sm:$0xf]
        %v456 = vld [vmem:[%s438 + $0x30] sm:$0xf]
        %v457 = vld [vmem:[%s438 + $0x34] sm:$0xf]
        %v458 = vld [vmem:[%s438 + $0x38] sm:$0xf]
        %v459 = vld [vmem:[%s438 + $0x3c] sm:$0xf]
        %p460 = scmp.eq.s32.totalorder %s30, 0
        // Predicated region
        $region73: #{tpu_custom_call.1} parent=59 // pred_check
          %p461 = pneg %p460
        $region74: #{tpu_custom_call.1} parent=59 // pred_check_branch
          %463 = sbr.rel (%p461) target = $region76
        $region75: #{tpu_custom_call.1} parent=59 // pred_region
          %v464 = vld [vmem:[%s1] sm:$0xf]
          %v465 = vld [vmem:[%s1 + $0x4] sm:$0xf]
          %v466 = vld [vmem:[%s1 + $0x8] sm:$0xf]
          %v467 = vld [vmem:[%s1 + $0xc] sm:$0xf]
          %v468 = vld [vmem:[%s1 + $0x10] sm:$0xf]
          %v469 = vld [vmem:[%s1 + $0x14] sm:$0xf]
          %v470 = vld [vmem:[%s1 + $0x18] sm:$0xf]
          %v471 = vld [vmem:[%s1 + $0x1c] sm:$0xf]
          %v472 = vld [vmem:[%s1 + $0x20] sm:$0xf]
          %v473 = vld [vmem:[%s1 + $0x24] sm:$0xf]
          %v474 = vld [vmem:[%s1 + $0x28] sm:$0xf]
          %v475 = vld [vmem:[%s1 + $0x2c] sm:$0xf]
          %v476 = vld [vmem:[%s1 + $0x30] sm:$0xf]
          %v477 = vld [vmem:[%s1 + $0x34] sm:$0xf]
          %v478 = vld [vmem:[%s1 + $0x38] sm:$0xf]
          %v479 = vld [vmem:[%s1 + $0x3c] sm:$0xf]
          %v480 = vld [vmem:[%s3] sm:$0x1]
          %v482 = vperm.slane %v480, 0
          %v500 = vunpack.c.l.b16 %v444
          %v501 = vunpack.c.l.b16 %v445
          %v502 = vunpack.c.l.b16 %v446
          %v503 = vunpack.c.l.b16 %v447
          %v504 = vunpack.c.l.b16 %v448
          %v505 = vunpack.c.l.b16 %v449
          %v506 = vunpack.c.l.b16 %v450
          %v507 = vunpack.c.l.b16 %v451
          %v508 = vunpack.c.l.b16 %v452
          %v509 = vunpack.c.l.b16 %v453
          %v510 = vunpack.c.l.b16 %v454
          %v511 = vunpack.c.l.b16 %v455
          %v512 = vunpack.c.l.b16 %v456
          %v513 = vunpack.c.l.b16 %v457
          %v514 = vunpack.c.l.b16 %v458
          %v515 = vunpack.c.l.b16 %v459
          %v516 = vpack.c.b16 %v501, %v500
          %v517 = vpack.c.b16 %v503, %v502
          %v518 = vpack.c.b16 %v505, %v504
          %v519 = vpack.c.b16 %v507, %v506
          %v520 = vpack.c.b16 %v509, %v508
          %v521 = vpack.c.b16 %v511, %v510
          %v522 = vpack.c.b16 %v513, %v512
          %v523 = vpack.c.b16 %v515, %v514
          %v548 = vunpack.c.l.b16 %v464
          %v549 = vunpack.c.l.b16 %v465
          %v550 = vunpack.c.l.b16 %v466
          %v551 = vunpack.c.l.b16 %v467
          %v552 = vunpack.c.l.b16 %v468
          %v553 = vunpack.c.l.b16 %v469
          %v554 = vunpack.c.l.b16 %v470
          %v555 = vunpack.c.l.b16 %v471
          %v556 = vunpack.c.l.b16 %v472
          %v557 = vunpack.c.l.b16 %v473
          %v558 = vunpack.c.l.b16 %v474
          %v559 = vunpack.c.l.b16 %v475
          %v560 = vunpack.c.l.b16 %v476
          %v561 = vunpack.c.l.b16 %v477
          %v562 = vunpack.c.l.b16 %v478
          %v563 = vunpack.c.l.b16 %v479
          %v564 = vpack.c.b16 %v549, %v548
          %v565 = vpack.c.b16 %v551, %v550
          %v566 = vpack.c.b16 %v553, %v552
          %v567 = vpack.c.b16 %v555, %v554
          %v568 = vpack.c.b16 %v557, %v556
          %v569 = vpack.c.b16 %v559, %v558
          %v570 = vpack.c.b16 %v561, %v560
          %v571 = vpack.c.b16 %v563, %v562
          %580 = vmatpush.bf16.msra.mxu0 %v571
          %581 = vmatpush.bf16.msra.mxu0 %v570
          %582 = vmatpush.bf16.msra.mxu0 %v569
          %583 = vmatpush.bf16.msra.mxu0 %v568
          %584 = vmatpush.bf16.msra.mxu0 %v567
          %585 = vmatpush.bf16.msra.mxu0 %v566
          %586 = vmatpush.bf16.msra.mxu0 %v565
          %587 = vmatpush.bf16.msra.mxu0 %v564
          %588 = vmatmul.bf16.gmra.mxu0 %v516
          %v589 = vpop.f32.mrf.mxu0
          %v590 = vadd.f32 %v482, %v589
          %v591 = vpop.f32.mrf.mxu0
          %v592 = vadd.f32 %v482, %v591
          %593 = vmatmul.bf16.gmra.mxu0 %v517
          %v594 = vpop.f32.mrf.mxu0
          %v595 = vadd.f32 %v482, %v594
          %v596 = vpop.f32.mrf.mxu0
          %v597 = vadd.f32 %v482, %v596
          %598 = vmatmul.bf16.gmra.mxu0 %v518
          %v599 = vpop.f32.mrf.mxu0
          %v600 = vadd.f32 %v482, %v599
          %v601 = vpop.f32.mrf.mxu0
          %v602 = vadd.f32 %v482, %v601
          %603 = vmatmul.bf16.gmra.mxu0 %v519
          %v604 = vpop.f32.mrf.mxu0
          %v605 = vadd.f32 %v482, %v604
          %v606 = vpop.f32.mrf.mxu0
          %v607 = vadd.f32 %v482, %v606
          %608 = vmatmul.bf16.gmra.mxu0 %v520
          %v609 = vpop.f32.mrf.mxu0
          %v610 = vadd.f32 %v482, %v609
          %v611 = vpop.f32.mrf.mxu0
          %v612 = vadd.f32 %v482, %v611
          %613 = vmatmul.bf16.gmra.mxu0 %v521
          %v614 = vpop.f32.mrf.mxu0
          %v615 = vadd.f32 %v482, %v614
          %v616 = vpop.f32.mrf.mxu0
          %v617 = vadd.f32 %v482, %v616
          %618 = vmatmul.bf16.gmra.mxu0 %v522
          %v619 = vpop.f32.mrf.mxu0
          %v620 = vadd.f32 %v482, %v619
          %v621 = vpop.f32.mrf.mxu0
          %v622 = vadd.f32 %v482, %v621
          %623 = vmatmul.bf16.gmra.mxu0 %v523
          %v624 = vpop.f32.mrf.mxu0
          %v625 = vadd.f32 %v482, %v624
          %v626 = vpop.f32.mrf.mxu0
          %v627 = vadd.f32 %v482, %v626
          %628 = vdwg.mxu0
          %v629 = vmax.f32 %v590, 0.0
          %v630 = vmax.f32 %v592, 0.0
          %v631 = vmax.f32 %v595, 0.0
          %v632 = vmax.f32 %v597, 0.0
          %v633 = vmax.f32 %v600, 0.0
          %v634 = vmax.f32 %v602, 0.0
          %v635 = vmax.f32 %v605, 0.0
          %v636 = vmax.f32 %v607, 0.0
          %v637 = vmax.f32 %v610, 0.0
          %v638 = vmax.f32 %v612, 0.0
          %v639 = vmax.f32 %v615, 0.0
          %v640 = vmax.f32 %v617, 0.0
          %v641 = vmax.f32 %v620, 0.0
          %v642 = vmax.f32 %v622, 0.0
          %v643 = vmax.f32 %v625, 0.0
          %v644 = vmax.f32 %v627, 0.0
          %v645 = vpack.c.bf16 %v629, %v629
          %v646 = vpack.c.bf16 %v630, %v630
          %v647 = vpack.c.bf16 %v631, %v631
          %v648 = vpack.c.bf16 %v632, %v632
          %v649 = vpack.c.bf16 %v633, %v633
          %v650 = vpack.c.bf16 %v634, %v634
          %v651 = vpack.c.bf16 %v635, %v635
          %v652 = vpack.c.bf16 %v636, %v636
          %v653 = vpack.c.bf16 %v637, %v637
          %v654 = vpack.c.bf16 %v638, %v638
          %v655 = vpack.c.bf16 %v639, %v639
          %v656 = vpack.c.bf16 %v640, %v640
          %v657 = vpack.c.bf16 %v641, %v641
          %v658 = vpack.c.bf16 %v642, %v642
          %v659 = vpack.c.bf16 %v643, %v643
          %v660 = vpack.c.bf16 %v644, %v644
          %s661 = sshra.s32 %s443, 3
          %s662 = sand.u32 %s443, 7
          %s663 = smul.addr %s661, 4
          %s664 = scalar_lea.vmem [#allocation2], %s663
          %vm665 = vcmask 257024
          %666 = vst.msk [vmem:[%s664] sm:$0xf] %vm665, %v645
          %667 = vst.msk [vmem:[%s664 + $0x4] sm:$0xf] %vm665, %v646
          %668 = vst.msk [vmem:[%s664 + $0x8] sm:$0xf] %vm665, %v647
          %669 = vst.msk [vmem:[%s664 + $0xc] sm:$0xf] %vm665, %v648
          %670 = vst.msk [vmem:[%s664 + $0x10] sm:$0xf] %vm665, %v649
          %671 = vst.msk [vmem:[%s664 + $0x14] sm:$0xf] %vm665, %v650
          %672 = vst.msk [vmem:[%s664 + $0x18] sm:$0xf] %vm665, %v651
          %673 = vst.msk [vmem:[%s664 + $0x1c] sm:$0xf] %vm665, %v652
          %674 = vst.msk [vmem:[%s664 + $0x20] sm:$0xf] %vm665, %v653
          %675 = vst.msk [vmem:[%s664 + $0x24] sm:$0xf] %vm665, %v654
          %676 = vst.msk [vmem:[%s664 + $0x28] sm:$0xf] %vm665, %v655
          %677 = vst.msk [vmem:[%s664 + $0x2c] sm:$0xf] %vm665, %v656
          %678 = vst.msk [vmem:[%s664 + $0x30] sm:$0xf] %vm665, %v657
          %679 = vst.msk [vmem:[%s664 + $0x34] sm:$0xf] %vm665, %v658
          %680 = vst.msk [vmem:[%s664 + $0x38] sm:$0xf] %vm665, %v659
          %681 = vst.msk [vmem:[%s664 + $0x3c] sm:$0xf] %vm665, %v660
        $region76: #{tpu_custom_call.1} parent=59 // pred_fallthru
          _
        %p682 = scmp.eq.s32.totalorder %s30, 1
        // Predicated region
        $region77: #{tpu_custom_call.1} parent=59 // pred_check
          %p683 = pneg %p682
        $region78: #{tpu_custom_call.1} parent=59 // pred_check_branch
          %685 = sbr.rel (%p683) target = $region80
        $region79: #{tpu_custom_call.1} parent=59 // pred_region
          %v686 = vld [vmem:[#allocation2] sm:$0xf]
          %v687 = vld [vmem:[#allocation2 + $0x4] sm:$0xf]
          %v688 = vld [vmem:[#allocation2 + $0x8] sm:$0xf]
          %v689 = vld [vmem:[#allocation2 + $0xc] sm:$0xf]
          %v690 = vld [vmem:[#allocation2 + $0x10] sm:$0xf]
          %v691 = vld [vmem:[#allocation2 + $0x14] sm:$0xf]
          %v692 = vld [vmem:[#allocation2 + $0x18] sm:$0xf]
          %v693 = vld [vmem:[#allocation2 + $0x1c] sm:$0xf]
          %v694 = vld [vmem:[#allocation2 + $0x20] sm:$0xf]
          %v695 = vld [vmem:[#allocation2 + $0x24] sm:$0xf]
          %v696 = vld [vmem:[#allocation2 + $0x28] sm:$0xf]
          %v697 = vld [vmem:[#allocation2 + $0x2c] sm:$0xf]
          %v698 = vld [vmem:[#allocation2 + $0x30] sm:$0xf]
          %v699 = vld [vmem:[#allocation2 + $0x34] sm:$0xf]
          %v700 = vld [vmem:[#allocation2 + $0x38] sm:$0xf]
          %v701 = vld [vmem:[#allocation2 + $0x3c] sm:$0xf]
          %v718 = vunpack.c.l.b16 %v444
          %v719 = vunpack.c.l.b16 %v445
          %v720 = vunpack.c.l.b16 %v446
          %v721 = vunpack.c.l.b16 %v447
          %v722 = vunpack.c.l.b16 %v448
          %v723 = vunpack.c.l.b16 %v449
          %v724 = vunpack.c.l.b16 %v450
          %v725 = vunpack.c.l.b16 %v451
          %v726 = vunpack.c.l.b16 %v452
          %v727 = vunpack.c.l.b16 %v453
          %v728 = vunpack.c.l.b16 %v454
          %v729 = vunpack.c.l.b16 %v455
          %v730 = vunpack.c.l.b16 %v456
          %v731 = vunpack.c.l.b16 %v457
          %v732 = vunpack.c.l.b16 %v458
          %v733 = vunpack.c.l.b16 %v459
          %v734 = vpack.c.b16 %v719, %v718
          %v735 = vpack.c.b16 %v721, %v720
          %v736 = vpack.c.b16 %v723, %v722
          %v737 = vpack.c.b16 %v725, %v724
          %v738 = vpack.c.b16 %v727, %v726
          %v739 = vpack.c.b16 %v729, %v728
          %v740 = vpack.c.b16 %v731, %v730
          %v741 = vpack.c.b16 %v733, %v732
          %v766 = vunpack.c.l.b16 %v686
          %v767 = vunpack.c.l.b16 %v687
          %v768 = vunpack.c.l.b16 %v688
          %v769 = vunpack.c.l.b16 %v689
          %v770 = vunpack.c.l.b16 %v690
          %v771 = vunpack.c.l.b16 %v691
          %v772 = vunpack.c.l.b16 %v692
          %v773 = vunpack.c.l.b16 %v693
          %v774 = vunpack.c.l.b16 %v694
          %v775 = vunpack.c.l.b16 %v695
          %v776 = vunpack.c.l.b16 %v696
          %v777 = vunpack.c.l.b16 %v697
          %v778 = vunpack.c.l.b16 %v698
          %v779 = vunpack.c.l.b16 %v699
          %v780 = vunpack.c.l.b16 %v700
          %v781 = vunpack.c.l.b16 %v701
          %v782 = vpack.c.b16 %v767, %v766
          %v783 = vpack.c.b16 %v769, %v768
          %v784 = vpack.c.b16 %v771, %v770
          %v785 = vpack.c.b16 %v773, %v772
          %v786 = vpack.c.b16 %v775, %v774
          %v787 = vpack.c.b16 %v777, %v776
          %v788 = vpack.c.b16 %v779, %v778
          %v789 = vpack.c.b16 %v781, %v780
          %798 = vmatpush.bf16.msra.mxu0 %v789
          %799 = vmatpush.bf16.msra.mxu0 %v788
          %800 = vmatpush.bf16.msra.mxu0 %v787
          %801 = vmatpush.bf16.msra.mxu0 %v786
          %802 = vmatpush.bf16.msra.mxu0 %v785
          %803 = vmatpush.bf16.msra.mxu0 %v784
          %804 = vmatpush.bf16.msra.mxu0 %v783
          %805 = vmatpush.bf16.msra.mxu0 %v782
          %806 = vmatmul.bf16.gmra.mxu0 %v734
          %v807 = vpop.f32.mrf.mxu0
          %v808 = vadd.f32 0.0, %v807
          %v809 = vpop.f32.mrf.mxu0
          %v810 = vadd.f32 0.0, %v809
          %811 = vmatmul.bf16.gmra.mxu0 %v735
          %v812 = vpop.f32.mrf.mxu0
          %v813 = vadd.f32 0.0, %v812
          %v814 = vpop.f32.mrf.mxu0
          %v815 = vadd.f32 0.0, %v814
          %816 = vmatmul.bf16.gmra.mxu0 %v736
          %v817 = vpop.f32.mrf.mxu0
          %v818 = vadd.f32 0.0, %v817
          %v819 = vpop.f32.mrf.mxu0
          %v820 = vadd.f32 0.0, %v819
          %821 = vmatmul.bf16.gmra.mxu0 %v737
          %v822 = vpop.f32.mrf.mxu0
          %v823 = vadd.f32 0.0, %v822
          %v824 = vpop.f32.mrf.mxu0
          %v825 = vadd.f32 0.0, %v824
          %826 = vmatmul.bf16.gmra.mxu0 %v738
          %v827 = vpop.f32.mrf.mxu0
          %v828 = vadd.f32 0.0, %v827
          %v829 = vpop.f32.mrf.mxu0
          %v830 = vadd.f32 0.0, %v829
          %831 = vmatmul.bf16.gmra.mxu0 %v739
          %v832 = vpop.f32.mrf.mxu0
          %v833 = vadd.f32 0.0, %v832
          %v834 = vpop.f32.mrf.mxu0
          %v835 = vadd.f32 0.0, %v834
          %836 = vmatmul.bf16.gmra.mxu0 %v740
          %v837 = vpop.f32.mrf.mxu0
          %v838 = vadd.f32 0.0, %v837
          %v839 = vpop.f32.mrf.mxu0
          %v840 = vadd.f32 0.0, %v839
          %841 = vmatmul.bf16.gmra.mxu0 %v741
          %v842 = vpop.f32.mrf.mxu0
          %v843 = vadd.f32 0.0, %v842
          %v844 = vpop.f32.mrf.mxu0
          %v845 = vadd.f32 0.0, %v844
          %846 = vdwg.mxu0
          %v847 = vpack.c.bf16 %v810, %v808
          %v848 = vpack.c.bf16 %v815, %v813
          %v849 = vpack.c.bf16 %v820, %v818
          %v850 = vpack.c.bf16 %v825, %v823
          %v851 = vpack.c.bf16 %v830, %v828
          %v852 = vpack.c.bf16 %v835, %v833
          %v853 = vpack.c.bf16 %v840, %v838
          %v854 = vpack.c.bf16 %v845, %v843
          %v855 = vld [vmem:[%s4] sm:$0xf]
          %v856 = vld [vmem:[%s4 + $0x4] sm:$0xf]
          %v857 = vld [vmem:[%s4 + $0x8] sm:$0xf]
          %v858 = vld [vmem:[%s4 + $0xc] sm:$0xf]
          %v859 = vld [vmem:[%s5] sm:$0x1]
          %v861 = vperm.slane %v859, 0
          %v867 = vunpack.c.l.b16 %v855
          %v868 = vunpack.c.l.b16 %v856
          %v869 = vunpack.c.l.b16 %v857
          %v870 = vunpack.c.l.b16 %v858
          %v871 = vpack.c.b16 %v868, %v867
          %v872 = vpack.c.b16 %v870, %v869
          %vm875 = vcmask 261120
          %v877 = vsel %vm875, %v847, 0
          %v880 = vsel %vm875, %v848, 0
          %v883 = vsel %vm875, %v849, 0
          %v886 = vsel %vm875, %v850, 0
          %v889 = vsel %vm875, %v851, 0
          %v892 = vsel %vm875, %v852, 0
          %v895 = vsel %vm875, %v853, 0
          %v898 = vsel %vm875, %v854, 0
          %900 = vmatpush.bf16.msra.mxu0 0
          %901 = vmatpush.bf16.msra.mxu0 0
          %902 = vmatpush.bf16.msra.mxu0 0
          %903 = vmatpush.bf16.msra.mxu0 0
          %904 = vmatpush.bf16.msra.mxu0 0
          %905 = vmatpush.bf16.msra.mxu0 0
          %906 = vmatpush.bf16.msra.mxu0 %v872
          %907 = vmatpush.bf16.msra.mxu0 %v871
          %908 = vmatmul.bf16.gmra.mxu0 %v877
          %v909 = vpop.f32.mrf.mxu0
          %v910 = vadd.f32 %v861, %v909
          %v911 = vpop.f32.mrf.mxu0
          %v912 = vadd.f32 %v861, %v911
          %913 = vmatmul.bf16.gmra.mxu0 %v880
          %v914 = vpop.f32.mrf.mxu0
          %v915 = vadd.f32 %v861, %v914
          %v916 = vpop.f32.mrf.mxu0
          %v917 = vadd.f32 %v861, %v916
          %918 = vmatmul.bf16.gmra.mxu0 %v883
          %v919 = vpop.f32.mrf.mxu0
          %v920 = vadd.f32 %v861, %v919
          %v921 = vpop.f32.mrf.mxu0
          %v922 = vadd.f32 %v861, %v921
          %923 = vmatmul.bf16.gmra.mxu0 %v886
          %v924 = vpop.f32.mrf.mxu0
          %v925 = vadd.f32 %v861, %v924
          %v926 = vpop.f32.mrf.mxu0
          %v927 = vadd.f32 %v861, %v926
          %928 = vmatmul.bf16.gmra.mxu0 %v889
          %v929 = vpop.f32.mrf.mxu0
          %v930 = vadd.f32 %v861, %v929
          %v931 = vpop.f32.mrf.mxu0
          %v932 = vadd.f32 %v861, %v931
          %933 = vmatmul.bf16.gmra.mxu0 %v892
          %v934 = vpop.f32.mrf.mxu0
          %v935 = vadd.f32 %v861, %v934
          %v936 = vpop.f32.mrf.mxu0
          %v937 = vadd.f32 %v861, %v936
          %938 = vmatmul.bf16.gmra.mxu0 %v895
          %v939 = vpop.f32.mrf.mxu0
          %v940 = vadd.f32 %v861, %v939
          %v941 = vpop.f32.mrf.mxu0
          %v942 = vadd.f32 %v861, %v941
          %943 = vmatmul.bf16.gmra.mxu0 %v898
          %v944 = vpop.f32.mrf.mxu0
          %v945 = vadd.f32 %v861, %v944
          %v946 = vpop.f32.mrf.mxu0
          %v947 = vadd.f32 %v861, %v946
          %948 = vdwg.mxu0
          %v949 = vmax.f32 %v910, 0.0
          %v950 = vmax.f32 %v912, 0.0
          %v951 = vmax.f32 %v915, 0.0
          %v952 = vmax.f32 %v917, 0.0
          %v953 = vmax.f32 %v920, 0.0
          %v954 = vmax.f32 %v922, 0.0
          %v955 = vmax.f32 %v925, 0.0
          %v956 = vmax.f32 %v927, 0.0
          %v957 = vmax.f32 %v930, 0.0
          %v958 = vmax.f32 %v932, 0.0
          %v959 = vmax.f32 %v935, 0.0
          %v960 = vmax.f32 %v937, 0.0
          %v961 = vmax.f32 %v940, 0.0
          %v962 = vmax.f32 %v942, 0.0
          %v963 = vmax.f32 %v945, 0.0
          %v964 = vmax.f32 %v947, 0.0
          %v965 = vpack.c.bf16 %v949, %v949
          %v966 = vpack.c.bf16 %v950, %v950
          %v967 = vpack.c.bf16 %v951, %v951
          %v968 = vpack.c.bf16 %v952, %v952
          %v969 = vpack.c.bf16 %v953, %v953
          %v970 = vpack.c.bf16 %v954, %v954
          %v971 = vpack.c.bf16 %v955, %v955
          %v972 = vpack.c.bf16 %v956, %v956
          %v973 = vpack.c.bf16 %v957, %v957
          %v974 = vpack.c.bf16 %v958, %v958
          %v975 = vpack.c.bf16 %v959, %v959
          %v976 = vpack.c.bf16 %v960, %v960
          %v977 = vpack.c.bf16 %v961, %v961
          %v978 = vpack.c.bf16 %v962, %v962
          %v979 = vpack.c.bf16 %v963, %v963
          %v980 = vpack.c.bf16 %v964, %v964
          %s981 = sshra.s32 %s443, 3
          %s982 = sand.u32 %s443, 7
          %s983 = smul.addr %s981, 4
          %s984 = scalar_lea.vmem [#allocation3], %s983
          %vm985 = vcmask 257024
          %986 = vst.msk [vmem:[%s984] sm:$0xf] %vm985, %v965
          %987 = vst.msk [vmem:[%s984 + $0x4] sm:$0xf] %vm985, %v966
          %988 = vst.msk [vmem:[%s984 + $0x8] sm:$0xf] %vm985, %v967
          %989 = vst.msk [vmem:[%s984 + $0xc] sm:$0xf] %vm985, %v968
          %990 = vst.msk [vmem:[%s984 + $0x10] sm:$0xf] %vm985, %v969
          %991 = vst.msk [vmem:[%s984 + $0x14] sm:$0xf] %vm985, %v970
          %992 = vst.msk [vmem:[%s984 + $0x18] sm:$0xf] %vm985, %v971
          %993 = vst.msk [vmem:[%s984 + $0x1c] sm:$0xf] %vm985, %v972
          %994 = vst.msk [vmem:[%s984 + $0x20] sm:$0xf] %vm985, %v973
          %995 = vst.msk [vmem:[%s984 + $0x24] sm:$0xf] %vm985, %v974
          %996 = vst.msk [vmem:[%s984 + $0x28] sm:$0xf] %vm985, %v975
          %997 = vst.msk [vmem:[%s984 + $0x2c] sm:$0xf] %vm985, %v976
          %998 = vst.msk [vmem:[%s984 + $0x30] sm:$0xf] %vm985, %v977
          %999 = vst.msk [vmem:[%s984 + $0x34] sm:$0xf] %vm985, %v978
          %1000 = vst.msk [vmem:[%s984 + $0x38] sm:$0xf] %vm985, %v979
          %1001 = vst.msk [vmem:[%s984 + $0x3c] sm:$0xf] %vm985, %v980
        $region80: #{tpu_custom_call.1} parent=59 // pred_fallthru
          _
        %p1002 = scmp.eq.s32.totalorder %s30, 2
        // Predicated region
        $region81: #{tpu_custom_call.1} parent=59 // pred_check
          %p1003 = pneg %p1002
        $region82: #{tpu_custom_call.1} parent=59 // pred_check_branch
          %1005 = sbr.rel (%p1003) target = $region84
        $region83: #{tpu_custom_call.1} parent=59 // pred_region
          %p1006 = scmp.eq.s32.totalorder %s31, 0
          // Predicated region
          $region85: #{tpu_custom_call.1} parent=83 // pred_check
            %p1007 = pneg %p1006
          $region86: #{tpu_custom_call.1} parent=83 // pred_check_branch
            %1009 = sbr.rel (%p1007) target = $region88
          $region87: #{tpu_custom_call.1} parent=83 // pred_region
            %vm1010 = vcmask 261120
            %1011 = vst.msk [vmem:[#allocation4] sm:$0xff] %vm1010, 0.0
            %1012 = vst.msk [vmem:[#allocation4 + $0x8] sm:$0xff] %vm1010, 0.0
          $region88: #{tpu_custom_call.1} parent=83 // pred_fallthru
            _
          %v1013 = vld [vmem:[#allocation3] sm:$0xf]
          %v1014 = vld [vmem:[#allocation3 + $0x4] sm:$0xf]
          %v1015 = vld [vmem:[#allocation3 + $0x8] sm:$0xf]
          %v1016 = vld [vmem:[#allocation3 + $0xc] sm:$0xf]
          %v1017 = vld [vmem:[#allocation3 + $0x10] sm:$0xf]
          %v1018 = vld [vmem:[#allocation3 + $0x14] sm:$0xf]
          %v1019 = vld [vmem:[#allocation3 + $0x18] sm:$0xf]
          %v1020 = vld [vmem:[#allocation3 + $0x1c] sm:$0xf]
          %v1021 = vld [vmem:[#allocation3 + $0x20] sm:$0xf]
          %v1022 = vld [vmem:[#allocation3 + $0x24] sm:$0xf]
          %v1023 = vld [vmem:[#allocation3 + $0x28] sm:$0xf]
          %v1024 = vld [vmem:[#allocation3 + $0x2c] sm:$0xf]
          %v1025 = vld [vmem:[#allocation3 + $0x30] sm:$0xf]
          %v1026 = vld [vmem:[#allocation3 + $0x34] sm:$0xf]
          %v1027 = vld [vmem:[#allocation3 + $0x38] sm:$0xf]
          %v1028 = vld [vmem:[#allocation3 + $0x3c] sm:$0xf]
          %v1045 = vunpack.c.l.b16 %v444
          %v1046 = vunpack.c.l.b16 %v445
          %v1047 = vunpack.c.l.b16 %v446
          %v1048 = vunpack.c.l.b16 %v447
          %v1049 = vunpack.c.l.b16 %v448
          %v1050 = vunpack.c.l.b16 %v449
          %v1051 = vunpack.c.l.b16 %v450
          %v1052 = vunpack.c.l.b16 %v451
          %v1053 = vunpack.c.l.b16 %v452
          %v1054 = vunpack.c.l.b16 %v453
          %v1055 = vunpack.c.l.b16 %v454
          %v1056 = vunpack.c.l.b16 %v455
          %v1057 = vunpack.c.l.b16 %v456
          %v1058 = vunpack.c.l.b16 %v457
          %v1059 = vunpack.c.l.b16 %v458
          %v1060 = vunpack.c.l.b16 %v459
          %v1061 = vpack.c.b16 %v1046, %v1045
          %v1062 = vpack.c.b16 %v1048, %v1047
          %v1063 = vpack.c.b16 %v1050, %v1049
          %v1064 = vpack.c.b16 %v1052, %v1051
          %v1065 = vpack.c.b16 %v1054, %v1053
          %v1066 = vpack.c.b16 %v1056, %v1055
          %v1067 = vpack.c.b16 %v1058, %v1057
          %v1068 = vpack.c.b16 %v1060, %v1059
          %v1093 = vunpack.c.l.b16 %v1013
          %v1094 = vunpack.c.l.b16 %v1014
          %v1095 = vunpack.c.l.b16 %v1015
          %v1096 = vunpack.c.l.b16 %v1016
          %v1097 = vunpack.c.l.b16 %v1017
          %v1098 = vunpack.c.l.b16 %v1018
          %v1099 = vunpack.c.l.b16 %v1019
          %v1100 = vunpack.c.l.b16 %v1020
          %v1101 = vunpack.c.l.b16 %v1021
          %v1102 = vunpack.c.l.b16 %v1022
          %v1103 = vunpack.c.l.b16 %v1023
          %v1104 = vunpack.c.l.b16 %v1024
          %v1105 = vunpack.c.l.b16 %v1025
          %v1106 = vunpack.c.l.b16 %v1026
          %v1107 = vunpack.c.l.b16 %v1027
          %v1108 = vunpack.c.l.b16 %v1028
          %v1109 = vpack.c.b16 %v1094, %v1093
          %v1110 = vpack.c.b16 %v1096, %v1095
          %v1111 = vpack.c.b16 %v1098, %v1097
          %v1112 = vpack.c.b16 %v1100, %v1099
          %v1113 = vpack.c.b16 %v1102, %v1101
          %v1114 = vpack.c.b16 %v1104, %v1103
          %v1115 = vpack.c.b16 %v1106, %v1105
          %v1116 = vpack.c.b16 %v1108, %v1107
          %1125 = vmatpush.bf16.msra.mxu0 %v1116
          %1126 = vmatpush.bf16.msra.mxu0 %v1115
          %1127 = vmatpush.bf16.msra.mxu0 %v1114
          %1128 = vmatpush.bf16.msra.mxu0 %v1113
          %1129 = vmatpush.bf16.msra.mxu0 %v1112
          %1130 = vmatpush.bf16.msra.mxu0 %v1111
          %1131 = vmatpush.bf16.msra.mxu0 %v1110
          %1132 = vmatpush.bf16.msra.mxu0 %v1109
          %1133 = vmatmul.bf16.gmra.mxu0 %v1061
          %v1134 = vpop.f32.mrf.mxu0
          %v1135 = vadd.f32 0.0, %v1134
          %v1136 = vpop.f32.mrf.mxu0
          %v1137 = vadd.f32 0.0, %v1136
          %1138 = vmatmul.bf16.gmra.mxu0 %v1062
          %v1139 = vpop.f32.mrf.mxu0
          %v1140 = vadd.f32 0.0, %v1139
          %v1141 = vpop.f32.mrf.mxu0
          %v1142 = vadd.f32 0.0, %v1141
          %1143 = vmatmul.bf16.gmra.mxu0 %v1063
          %v1144 = vpop.f32.mrf.mxu0
          %v1145 = vadd.f32 0.0, %v1144
          %v1146 = vpop.f32.mrf.mxu0
          %v1147 = vadd.f32 0.0, %v1146
          %1148 = vmatmul.bf16.gmra.mxu0 %v1064
          %v1149 = vpop.f32.mrf.mxu0
          %v1150 = vadd.f32 0.0, %v1149
          %v1151 = vpop.f32.mrf.mxu0
          %v1152 = vadd.f32 0.0, %v1151
          %1153 = vmatmul.bf16.gmra.mxu0 %v1065
          %v1154 = vpop.f32.mrf.mxu0
          %v1155 = vadd.f32 0.0, %v1154
          %v1156 = vpop.f32.mrf.mxu0
          %v1157 = vadd.f32 0.0, %v1156
          %1158 = vmatmul.bf16.gmra.mxu0 %v1066
          %v1159 = vpop.f32.mrf.mxu0
          %v1160 = vadd.f32 0.0, %v1159
          %v1161 = vpop.f32.mrf.mxu0
          %v1162 = vadd.f32 0.0, %v1161
          %1163 = vmatmul.bf16.gmra.mxu0 %v1067
          %v1164 = vpop.f32.mrf.mxu0
          %v1165 = vadd.f32 0.0, %v1164
          %v1166 = vpop.f32.mrf.mxu0
          %v1167 = vadd.f32 0.0, %v1166
          %1168 = vmatmul.bf16.gmra.mxu0 %v1068
          %v1169 = vpop.f32.mrf.mxu0
          %v1170 = vadd.f32 0.0, %v1169
          %v1171 = vpop.f32.mrf.mxu0
          %v1172 = vadd.f32 0.0, %v1171
          %1173 = vdwg.mxu0
          %v1174 = vpack.c.bf16 %v1137, %v1135
          %v1175 = vpack.c.bf16 %v1142, %v1140
          %v1176 = vpack.c.bf16 %v1147, %v1145
          %v1177 = vpack.c.bf16 %v1152, %v1150
          %v1178 = vpack.c.bf16 %v1157, %v1155
          %v1179 = vpack.c.bf16 %v1162, %v1160
          %v1180 = vpack.c.bf16 %v1167, %v1165
          %v1181 = vpack.c.bf16 %v1172, %v1170
          %v1182 = vld [vmem:[#allocation8] sm:$0xf]
          %v1183 = vld [vmem:[#allocation8 + $0x4] sm:$0xf]
          %v1184 = vld [vmem:[#allocation8 + $0x8] sm:$0xf]
          %v1185 = vld [vmem:[#allocation8 + $0xc] sm:$0xf]
          %v1186 = vld [vmem:[%s7] sm:$0x1]
          %v1188 = vperm.slane %v1186, 0
          %v1194 = vunpack.c.l.b16 %v1182
          %v1195 = vunpack.c.l.b16 %v1183
          %v1196 = vunpack.c.l.b16 %v1184
          %v1197 = vunpack.c.l.b16 %v1185
          %v1198 = vpack.c.b16 %v1195, %v1194
          %v1199 = vpack.c.b16 %v1197, %v1196
          %vm1202 = vcmask 261120
          %v1204 = vsel %vm1202, %v1174, 0
          %v1207 = vsel %vm1202, %v1175, 0
          %v1210 = vsel %vm1202, %v1176, 0
          %v1213 = vsel %vm1202, %v1177, 0
          %v1216 = vsel %vm1202, %v1178, 0
          %v1219 = vsel %vm1202, %v1179, 0
          %v1222 = vsel %vm1202, %v1180, 0
          %v1225 = vsel %vm1202, %v1181, 0
          %1227 = vmatpush.bf16.msra.mxu0 0
          %1228 = vmatpush.bf16.msra.mxu0 0
          %1229 = vmatpush.bf16.msra.mxu0 0
          %1230 = vmatpush.bf16.msra.mxu0 0
          %1231 = vmatpush.bf16.msra.mxu0 0
          %1232 = vmatpush.bf16.msra.mxu0 0
          %1233 = vmatpush.bf16.msra.mxu0 %v1199
          %1234 = vmatpush.bf16.msra.mxu0 %v1198
          %1235 = vmatmul.bf16.gmra.mxu0 %v1204
          %v1236 = vpop.f32.mrf.mxu0
          %v1237 = vadd.f32 %v1188, %v1236
          %v1238 = vpop.f32.mrf.mxu0
          %v1239 = vadd.f32 %v1188, %v1238
          %1240 = vmatmul.bf16.gmra.mxu0 %v1207
          %v1241 = vpop.f32.mrf.mxu0
          %v1242 = vadd.f32 %v1188, %v1241
          %v1243 = vpop.f32.mrf.mxu0
          %v1244 = vadd.f32 %v1188, %v1243
          %1245 = vmatmul.bf16.gmra.mxu0 %v1210
          %v1246 = vpop.f32.mrf.mxu0
          %v1247 = vadd.f32 %v1188, %v1246
          %v1248 = vpop.f32.mrf.mxu0
          %v1249 = vadd.f32 %v1188, %v1248
          %1250 = vmatmul.bf16.gmra.mxu0 %v1213
          %v1251 = vpop.f32.mrf.mxu0
          %v1252 = vadd.f32 %v1188, %v1251
          %v1253 = vpop.f32.mrf.mxu0
          %v1254 = vadd.f32 %v1188, %v1253
          %1255 = vmatmul.bf16.gmra.mxu0 %v1216
          %v1256 = vpop.f32.mrf.mxu0
          %v1257 = vadd.f32 %v1188, %v1256
          %v1258 = vpop.f32.mrf.mxu0
          %v1259 = vadd.f32 %v1188, %v1258
          %1260 = vmatmul.bf16.gmra.mxu0 %v1219
          %v1261 = vpop.f32.mrf.mxu0
          %v1262 = vadd.f32 %v1188, %v1261
          %v1263 = vpop.f32.mrf.mxu0
          %v1264 = vadd.f32 %v1188, %v1263
          %1265 = vmatmul.bf16.gmra.mxu0 %v1222
          %v1266 = vpop.f32.mrf.mxu0
          %v1267 = vadd.f32 %v1188, %v1266
          %v1268 = vpop.f32.mrf.mxu0
          %v1269 = vadd.f32 %v1188, %v1268
          %1270 = vmatmul.bf16.gmra.mxu0 %v1225
          %v1271 = vpop.f32.mrf.mxu0
          %v1272 = vadd.f32 %v1188, %v1271
          %v1273 = vpop.f32.mrf.mxu0
          %v1274 = vadd.f32 %v1188, %v1273
          %1275 = vdwg.mxu0
          %v1276 = vld [vmem:[#allocation4] sm:$0xff]
          %v1277 = vld [vmem:[#allocation4 + $0x8] sm:$0xff]
          %v1278 = vld [vmem:[%s386] sm:$0xf]
          %v1279 = vld [vmem:[%s386 + $0x4] sm:$0xf]
          %v1280 = vpack.c.bf16 %v1239, %v1237
          %v1281 = vpack.c.bf16 %v1244, %v1242
          %v1282 = vpack.c.bf16 %v1249, %v1247
          %v1283 = vpack.c.bf16 %v1254, %v1252
          %v1284 = vpack.c.bf16 %v1259, %v1257
          %v1285 = vpack.c.bf16 %v1264, %v1262
          %v1286 = vpack.c.bf16 %v1269, %v1267
          %v1287 = vpack.c.bf16 %v1274, %v1272
          %v1290 = vunpack.c.l.b16 %v1278
          %v1291 = vunpack.c.l.b16 %v1279
          %v1292 = vpack.c.b16 %v1291, %v1290
          %1294 = vmatpush.bf16.msra.mxu0 %v1287
          %1295 = vmatpush.bf16.msra.mxu0 %v1286
          %1296 = vmatpush.bf16.msra.mxu0 %v1285
          %1297 = vmatpush.bf16.msra.mxu0 %v1284
          %1298 = vmatpush.bf16.msra.mxu0 %v1283
          %1299 = vmatpush.bf16.msra.mxu0 %v1282
          %1300 = vmatpush.bf16.msra.mxu0 %v1281
          %1301 = vmatpush.bf16.msra.mxu0 %v1280
          %1302 = vmatmul.bf16.gmra.mxu0 %v1292
          %v1303 = vpop.f32.mrf.mxu0
          %v1304 = vadd.f32 0.0, %v1303
          %v1305 = vpop.f32.mrf.mxu0
          %v1306 = vadd.f32 0.0, %v1305
          %1307 = vdwg.mxu0
          %v1308 = vadd.f32 %v1276, %v1304
          %v1309 = vadd.f32 %v1277, %v1306
          %1310 = vst.msk [vmem:[#allocation4] sm:$0xff] %vm1202, %v1308
          %1311 = vst.msk [vmem:[#allocation4 + $0x8] sm:$0xff] %vm1202, %v1309
          // Predicated region
          $region89: #{tpu_custom_call.1} parent=83 // pred_check
            %p1312 = pneg %p1006
          $region90: #{tpu_custom_call.1} parent=83 // pred_check_branch
            %1314 = sbr.rel (%p1312) target = $region92
          $region91: #{tpu_custom_call.1} parent=83 // pred_region
            %v1315 = vld [vmem:[#allocation4] sm:$0xff]
            %v1316 = vld [vmem:[#allocation4 + $0x8] sm:$0xff]
            %v1317 = vld [vmem:[#allocation10] sm:$0xff]
            %v1318 = vld [vmem:[#allocation10 + $0x8] sm:$0xff]
            %v1319 = vld [vmem:[#allocation10 + $0x10] sm:$0xff]
            %v1320 = vld [vmem:[#allocation10 + $0x18] sm:$0xff]
            %v1321 = vld [vmem:[%s9] sm:$0x1]
            %v1323 = vperm.slane %v1321, 0
            %v1326 = vsel %vm1202, %v1315, 0
            %v1329 = vsel %vm1202, %v1316, 0
            %1331 = vmatpush.msra.mxu0 0.0
            %1332 = vmatpush.msra.mxu0 0.0
            %1333 = vmatpush.msra.mxu0 0.0
            %1334 = vmatpush.msra.mxu0 0.0
            %1335 = vmatpush.msra.mxu0 0.0
            %1336 = vmatpush.msra.mxu0 0.0
            %1337 = vmatpush.msra.mxu0 0.0
            %1338 = vmatpush.msra.mxu0 0.0
            %1339 = vmatpush.msra.mxu0 0.0
            %1340 = vmatpush.msra.mxu0 0.0
            %1341 = vmatpush.msra.mxu0 0.0
            %1342 = vmatpush.msra.mxu0 0.0
            %1343 = vmatpush.msra.mxu0 %v1320
            %1344 = vmatpush.msra.mxu0 %v1319
            %1345 = vmatpush.msra.mxu0 %v1318
            %1346 = vmatpush.msra.mxu0 %v1317
            %1347 = vmatmul.f32.gmra.mxu0 %v1326
            %v1348 = vpop.f32.mrf.mxu0
            %v1349 = vadd.f32 %v1323, %v1348
            %1350 = vmatmul.f32.gmra.mxu0 %v1329
            %v1351 = vpop.f32.mrf.mxu0
            %v1352 = vadd.f32 %v1323, %v1351
            %1353 = vdwg.mxu0
            %1354 = vst [vmem:[#allocation11] sm:$0xff] %v1349
            %1355 = vst [vmem:[#allocation11 + $0x8] sm:$0xff] %v1352
          $region92: #{tpu_custom_call.1} parent=83 // pred_fallthru
            _
        $region84: #{tpu_custom_call.1} parent=59 // pred_fallthru
          _
        // Predicated region
        $region93: #{tpu_custom_call.1} parent=59 // pred_check
          %p1356 = pneg %p275
        $region94: #{tpu_custom_call.1} parent=59 // pred_check_branch
          %1358 = sbr.rel (%p1356) target = $region96
        $region95: #{tpu_custom_call.1} parent=59 // pred_region
          %1360 = vsyncadd [#allocation7], 0
          %s1361 = sshll.u32 [#allocation11], 4
          %s1362 = int_to_ptr.vmem [resolvable:$true] %s1361
          %s1363 = sshll.u32 %s10, 4
          %s1364 = int_to_ptr.hbm [resolvable:$true] %s1363
          %1369 = dma.vmem_to_hbm [thread:$0]  %s1362, 256, %s1364, [#allocation7], 128, 128, 8
        $region96: #{tpu_custom_call.1} parent=59 // pred_fallthru
          _
        // Predicated region
        $region97: #{tpu_custom_call.1} parent=59 // pred_check
          %p1370 = pneg %p275
        $region98: #{tpu_custom_call.1} parent=59 // pred_check_branch
          %1372 = sbr.rel (%p1370) target = $region100
        $region99: #{tpu_custom_call.1} parent=59 // pred_region
          %1374 = dma.done [#allocation7], 256
        $region100: #{tpu_custom_call.1} parent=59 // pred_fallthru
          _
      $region60: #{tpu_custom_call.1} parent=5 // pred_fallthru
        _
      %p1375 = scmp.le.s32.totalorder 2, %s21
      // Predicated region
      $region101: #{tpu_custom_call.1} parent=5 // pred_check
        %p1376 = pneg %p1375
      $region102: #{tpu_custom_call.1} parent=5 // pred_check_branch
        %1378 = sbr.rel (%p1376) target = $region104
      $region103: #{tpu_custom_call.1} parent=5 // pred_region
        %s1379 = ssub.s32 %s21, 2
      $region104: #{tpu_custom_call.1} parent=5 // pred_fallthru
        _
    $region6: #{tpu_custom_call.1} parent=1 // loop_footer
      %s25 = sadd.s32 1, %s21
    $region7: #{tpu_custom_call.1} parent=1 // loop_footer_branch
      %20 = sbr.rel target = $region3
    $region8: #{tpu_custom_call.1} parent=1 // loop_exit
      _
    %1380 = vsyncpa [#allocation6], 1
    %s1381 = scalar_lea.sflag [#allocation6], 1
    %1382 = vsyncpa %s1381, 1
    %1383 = vsyncpa [#allocation9], 1
    %1384 = vsyncpa [#allocation7], 1
    %s1385 = scalar_lea.sflag [#allocation7], 1
    %1386 = vsyncpa %s1385, 1

</llo_original>
